<compile_context>
chip_gen: v5e
topology: v5e:2x2
jax: 0.10.0
libtpu: 0.0.40
codegen_flags: <defaults>
</compile_context>

<pallas_src>
import functools

import jax
import jax.numpy as jnp
import numpy as np
from jax.experimental import pallas as pl
from jax.experimental.pallas import tpu as pltpu


def _round_up(x, m):
    return (x + m - 1) // m * m


def _vmem_capacity_bytes():
    try:
        return int(pltpu.get_tpu_info().vmem_capacity_bytes)
    except Exception:  # conservative fallback (v7x per-TC VMEM)
        return 64 << 20


def _critic_kernel(xa_ref,
                   w1_ref, b1_ref, g1_ref, be1_ref,
                   w2x_ref, w2a_ref, b2_ref, g2_ref, be2_ref,
                   wh_ref, bh_ref, gh_ref, beh_ref,
                   wo_ref, bo_ref,
                   out_ref, *, n_hidden_layers, eps):
    mm_dtype = w1_ref.dtype  # matmul input dtype (bf16 default, f32 for parity)

    def layernorm(h, gamma, beta):
        # f32 statistics, biased variance (PyTorch), (h - mu) computed once.
        mu = jnp.mean(h, axis=-1, keepdims=True)
        c = h - mu
        var = jnp.mean(c * c, axis=-1, keepdims=True)
        return c * jax.lax.rsqrt(var + eps) * gamma + beta

    xa = xa_ref[...].astype(mm_dtype)  # (TB, O+A) streamed tile

    # Hoist the small (1, H) parameter reads once (broadcasts are not CSE'd).
    b1, g1, be1 = b1_ref[...], g1_ref[...], be1_ref[...]
    b2, g2, be2 = b2_ref[...], g2_ref[...], be2_ref[...]

    # linear1 -> norm1 -> relu   (W1 zero-extended over the action columns)
    h = jnp.dot(xa, w1_ref[...], preferred_element_type=jnp.float32) + b1
    h = jnp.maximum(layernorm(h, g1, be1), 0.0)

    # cat([h, a], 1) @ W2 + b2  ==  h @ W2x + xa @ W2a_ext + b2
    h = (jnp.dot(h.astype(mm_dtype), w2x_ref[...],
                 preferred_element_type=jnp.float32)
         + jnp.dot(xa, w2a_ref[...], preferred_element_type=jnp.float32)
         + b2)
    h = jnp.maximum(layernorm(h, g2, be2), 0.0)

    # hidden stack: Linear -> relu -> LayerNorm -> relu
    def body(l, h):
        h = (jnp.dot(h.astype(mm_dtype), wh_ref[l],
                     preferred_element_type=jnp.float32) + bh_ref[l])
        h = jnp.maximum(h, 0.0)
        h = jnp.maximum(layernorm(h, gh_ref[l], beh_ref[l]), 0.0)
        return h

    h = jax.lax.fori_loop(0, n_hidden_layers, body, h, unroll=True)

    # linear_out, packed lane-dense: (1,H) x (TB,H)^T -> (1,TB) row of values.
    row = jax.lax.dot_general(
        wo_ref[...], h.astype(mm_dtype),
        dimension_numbers=(((1,), (1,)), ((), ())),
        preferred_element_type=jnp.float32)
    out_ref[...] = (row + bo_ref[...])[None]          # (1, 1, TB)


def ddpg_critic_forward(x, a, params, *, hidden_size, n_hidden_layers,
                        block_b=512, matmul_dtype=jnp.bfloat16):
    B, O = x.shape
    A = a.shape[1]
    OA = O + A
    H = hidden_size
    L = n_hidden_layers
    eps = float(hidden_size)  # LayerNorm(hidden, hidden) -> eps = hidden_size
    md = jnp.dtype(matmul_dtype)

    vmem_cap = _vmem_capacity_bytes()

    # ---- batch tiling: balanced tiles, >=2 grid steps when B allows (v7x
    # megacore), TB capped so (TB,H) f32 intermediates stay inside VMEM.
    n_tiles = pl.cdiv(B, block_b)
    if B > 8:
        n_tiles = max(n_tiles, 2)
    TB = _round_up(max(8, pl.cdiv(B, n_tiles)), 8)
    tb_cap = max(8, (((vmem_cap // 4) // max(1, 8 * H * 4)) // 8) * 8)
    TB = min(TB, tb_cap)
    n_tiles = pl.cdiv(B, TB)
    Bp = n_tiles * TB

    # single streamed input: cat([x, a], 1), row-padded to a tile multiple.
    xa = jnp.concatenate([x, a], axis=1)
    if Bp != B:
        xa = jnp.pad(xa, ((0, Bp - B), (0, 0)))

    # ---- weights: matmul operands cast to matmul_dtype; LN/bias stay f32.
    w1e = jnp.concatenate(
        [params["w1t"], jnp.zeros((A, H), jnp.float32)], axis=0).astype(md)
    w2ae = jnp.concatenate(
        [jnp.zeros((O, H), jnp.float32), params["w2at"]], axis=0).astype(md)
    w2x = params["w2xt"].astype(md)
    if L > 0:
        wh = params["wht"].astype(md)
        bh, gh, beh = params["bh"], params["gh"], params["beh"]
    else:  # dummy one-layer stack; fori_loop(0, 0) never reads it
        wh = jnp.zeros((1, H, H), md)
        bh = jnp.zeros((1, 1, H), jnp.float32)
        gh = jnp.ones((1, 1, H), jnp.float32)
        beh = jnp.zeros((1, 1, H), jnp.float32)
    wo = params["wo"].astype(md)                       # real (1, H) row
    bo = params["bo"].astype(jnp.float32)              # (1, 1)

    flat = (w1e, params["b1"], params["g1"], params["be1"],
            w2x, w2ae, params["b2"], params["g2"], params["be2"],
            wh, bh, gh, beh, wo, bo)

    # ---- generation-aware VMEM budget.
    nbytes = lambda t: int(t.size) * t.dtype.itemsize
    resident = sum(nbytes(t) for t in flat)            # single-buffered weights
    streamed = 2 * (TB * OA * 4 + TB * 4)              # dbl-buffered xa + out
    interm = 6 * TB * H * 4                            # live f32 activations
    headroom = 16 << 20                                # compiler scratch
    if resident + streamed + interm + headroom > vmem_cap:
        # TODO(synk): stream the (L,H,H) hidden weights from HBM with
        # make_async_copy double-buffering instead of failing here.
        raise NotImplementedError(
            "Weight stack too large for single-pass VMEM residency "
            f"({resident} B resident vs {vmem_cap} B VMEM).")

    kernel = functools.partial(_critic_kernel, n_hidden_layers=L, eps=eps)

    def call(single_buffer_weights):
        const_kw = {}
        if single_buffer_weights and hasattr(pl, "Buffered"):
            const_kw["pipeline_mode"] = pl.Buffered(1)

        def const_spec(t):
            zero = (0,) * t.ndim
            return pl.BlockSpec(t.shape, lambda i, _z=zero: _z, **const_kw)

        in_specs = ([pl.BlockSpec((TB, OA), lambda i: (i, 0))]
                    + [const_spec(t) for t in flat])
        mult = 1 if single_buffer_weights else 2
        vmem_limit = int(min(mult * resident + streamed + interm + headroom,
                             vmem_cap))
        return pl.pallas_call(
            kernel,
            grid=(n_tiles,),
            out_shape=jax.ShapeDtypeStruct((n_tiles, 1, TB), jnp.float32),
            in_specs=in_specs,
            out_specs=pl.BlockSpec((1, 1, TB), lambda i: (i, 0, 0)),
            compiler_params=pltpu.CompilerParams(
                dimension_semantics=("parallel",),
                vmem_limit_bytes=vmem_limit),
        )(xa, *flat)

    try:
        out = call(True)
    except Exception:
        # Fallback for JAX builds where pipeline_mode=pl.Buffered(1) on
        # constant blocks is not supported; identical math, 2x resident VMEM.
        out = call(False)

    return out.reshape(-1)[:B].reshape(B, 1)


# ----------------------------------------------------------------------------
# Deterministic parameter construction (mirrors nn.Linear / nn.LayerNorm init)
# ----------------------------------------------------------------------------
def _linear_init(key, fan_in, fan_out):
    k1, k2 = jax.random.split(key)
    bound = 1.0 / np.sqrt(fan_in)
    w = jax.random.uniform(k1, (fan_out, fan_in), jnp.float32, -bound, bound)
    b = jax.random.uniform(k2, (fan_out,), jnp.float32, -bound, bound)
    return w, b


def make_params(key, obs_size, act_size, hidden_size, n_hidden_layers):
    keys = jax.random.split(key, 3 + n_hidden_layers)
    H, O, A, L = hidden_size, obs_size, act_size, n_hidden_layers

    w1, b1 = _linear_init(keys[0], O, H)            # torch weight (H, O)
    w2, b2 = _linear_init(keys[1], H + A, H)        # torch weight (H, H+A)
    wo, bo = _linear_init(keys[2], H, 1)            # torch weight (1, H)
    wo = wo * 0.1                                   # linear_out.weight.mul_(0.1)
    bo = bo * 0.1                                   # linear_out.bias.mul_(0.1)

    wh = np.zeros((max(L, 1), H, H), np.float32)
    bh = np.zeros((max(L, 1), 1, H), np.float32)
    for l in range(L):
        w, b = _linear_init(keys[3 + l], H, H)
        wh[l] = np.asarray(w).T                     # store transposed (in, out)
        bh[l, 0] = np.asarray(b)

    ones = jnp.ones((1, H), jnp.float32)
    zeros = jnp.zeros((1, H), jnp.float32)

    return {
        "w1t": jnp.asarray(w1).T,                   # (O, H)
        "b1": jnp.asarray(b1).reshape(1, H),
        "g1": ones, "be1": zeros,
        "w2xt": jnp.asarray(w2[:, :H]).T,           # (H, H)
        "w2at": jnp.asarray(w2[:, H:]).T,           # (A, H)
        "b2": jnp.asarray(b2).reshape(1, H),
        "g2": ones, "be2": zeros,
        "wht": jnp.asarray(wh[:max(L, 1)]),         # (L, H, H)
        "bh": jnp.asarray(bh[:max(L, 1)]),          # (L, 1, H)
        "gh": jnp.ones((max(L, 1), 1, H), jnp.float32),
        "beh": jnp.zeros((max(L, 1), 1, H), jnp.float32),
        "wo": jnp.asarray(wo),                      # (1, H) torch layout
        "bo": jnp.asarray(bo).reshape(1, 1),
    }


# Pure-JAX reference (mirrors the PyTorch forward op-for-op) for verification.
def reference_forward(x, a, p, *, hidden_size, n_hidden_layers):
    eps = float(hidden_size)

    def ln(h, g, b):
        mu = jnp.mean(h, axis=-1, keepdims=True)
        var = jnp.mean((h - mu) ** 2, axis=-1, keepdims=True)
        return (h - mu) / jnp.sqrt(var + eps) * g + b

    h = x @ p["w1t"] + p["b1"]
    h = jnp.maximum(ln(h, p["g1"], p["be1"]), 0.0)
    h = h @ p["w2xt"] + a @ p["w2at"] + p["b2"]
    h = jnp.maximum(ln(h, p["g2"], p["be2"]), 0.0)
    for l in range(n_hidden_layers):
        h = jnp.maximum(h @ p["wht"][l] + p["bh"][l], 0.0)
        h = jnp.maximum(ln(h, p["gh"][l], p["beh"][l]), 0.0)
    return h @ p["wo"].T + p["bo"]


if __name__ == "__main__":
    B, OBS, ACT, HID, NLAYERS = 8, 16, 4, 32, 2

    key = jax.random.PRNGKey(0)
    kx, ka, kp = jax.random.split(key, 3)
    x = jax.random.normal(kx, (B, OBS), jnp.float32)
    a = jax.random.normal(ka, (B, ACT), jnp.float32)
    params = make_params(kp, OBS, ACT, HID, NLAYERS)

    ref = reference_forward(x, a, params,
                            hidden_size=HID, n_hidden_layers=NLAYERS)

    # strict-parity f32 path: must match the f32 reference tightly.
    out_f32 = ddpg_critic_forward(x, a, params,
                                  hidden_size=HID, n_hidden_layers=NLAYERS,
                                  matmul_dtype=jnp.float32)
    out_f32 = jax.block_until_ready(out_f32)
    np.testing.assert_allclose(np.asarray(out_f32), np.asarray(ref),
                               rtol=1e-5, atol=1e-5)

    # default bf16-matmul fast path (native MXU): f32 accumulation + f32 LN
    # stats, validated at bf16-appropriate tolerance.
    out_bf16 = ddpg_critic_forward(x, a, params,
                                   hidden_size=HID, n_hidden_layers=NLAYERS)
    out_bf16 = jax.block_until_ready(out_bf16)
    np.testing.assert_allclose(np.asarray(out_bf16), np.asarray(ref),
                               rtol=5e-2, atol=5e-2)

    print("KERNEL_OK")
</pallas_src>

<mosaic_0001>
module attributes {stable_mosaic.version = 11 : i64} {
  func.func @_critic_kernel(%arg0: i32, %arg1: memref<8x20xf32, #tpu.memory_space<vmem>>, %arg2: memref<20x32xf32, #tpu.memory_space<vmem>>, %arg3: memref<1x32xf32, #tpu.memory_space<vmem>>, %arg4: memref<1x32xf32, #tpu.memory_space<vmem>>, %arg5: memref<1x32xf32, #tpu.memory_space<vmem>>, %arg6: memref<32x32xf32, #tpu.memory_space<vmem>>, %arg7: memref<20x32xf32, #tpu.memory_space<vmem>>, %arg8: memref<1x32xf32, #tpu.memory_space<vmem>>, %arg9: memref<1x32xf32, #tpu.memory_space<vmem>>, %arg10: memref<1x32xf32, #tpu.memory_space<vmem>>, %arg11: memref<2x32x32xf32, #tpu.memory_space<vmem>>, %arg12: memref<2x1x32xf32, #tpu.memory_space<vmem>>, %arg13: memref<2x1x32xf32, #tpu.memory_space<vmem>>, %arg14: memref<2x1x32xf32, #tpu.memory_space<vmem>>, %arg15: memref<1x32xf32, #tpu.memory_space<vmem>>, %arg16: memref<1x1xf32, #tpu.memory_space<vmem>>, %arg17: memref<1x1x8xf32, #tpu.memory_space<vmem>>) attributes {dimension_semantics = [#tpu.dimension_semantics<parallel>], iteration_bounds = array<i64: 1>, scalar_prefetch = 0 : i64, scratch_operands = 0 : i64, tpu.core_type = #tpu.core_type<tc>, window_params = [{transform_indices = @transform_0, window_bounds = array<i64: 8, 20>}, {pipeline_mode = #tpu.pipeline_mode<synchronous>, transform_indices = @transform_1, window_bounds = array<i64: 20, 32>}, {pipeline_mode = #tpu.pipeline_mode<synchronous>, transform_indices = @transform_2, window_bounds = array<i64: 1, 32>}, {pipeline_mode = #tpu.pipeline_mode<synchronous>, transform_indices = @transform_3, window_bounds = array<i64: 1, 32>}, {pipeline_mode = #tpu.pipeline_mode<synchronous>, transform_indices = @transform_4, window_bounds = array<i64: 1, 32>}, {pipeline_mode = #tpu.pipeline_mode<synchronous>, transform_indices = @transform_5, window_bounds = array<i64: 32, 32>}, {pipeline_mode = #tpu.pipeline_mode<synchronous>, transform_indices = @transform_6, window_bounds = array<i64: 20, 32>}, {pipeline_mode = #tpu.pipeline_mode<synchronous>, transform_indices = @transform_7, window_bounds = array<i64: 1, 32>}, {pipeline_mode = #tpu.pipeline_mode<synchronous>, transform_indices = @transform_8, window_bounds = array<i64: 1, 32>}, {pipeline_mode = #tpu.pipeline_mode<synchronous>, transform_indices = @transform_9, window_bounds = array<i64: 1, 32>}, {pipeline_mode = #tpu.pipeline_mode<synchronous>, transform_indices = @transform_10, window_bounds = array<i64: 2, 32, 32>}, {pipeline_mode = #tpu.pipeline_mode<synchronous>, transform_indices = @transform_11, window_bounds = array<i64: 2, 1, 32>}, {pipeline_mode = #tpu.pipeline_mode<synchronous>, transform_indices = @transform_12, window_bounds = array<i64: 2, 1, 32>}, {pipeline_mode = #tpu.pipeline_mode<synchronous>, transform_indices = @transform_13, window_bounds = array<i64: 2, 1, 32>}, {pipeline_mode = #tpu.pipeline_mode<synchronous>, transform_indices = @transform_14, window_bounds = array<i64: 1, 32>}, {pipeline_mode = #tpu.pipeline_mode<synchronous>, transform_indices = @transform_15, window_bounds = array<i64: 1, 1>}, {transform_indices = @transform_16, window_bounds = array<i64: 1, 1, 8>}]} {
    %c0 = arith.constant 0 : index
    %c0_0 = arith.constant 0 : index
    %0 = vector.load %arg1[%c0, %c0_0] : memref<8x20xf32, #tpu.memory_space<vmem>>, vector<8x20xf32>
    %c0_1 = arith.constant 0 : index
    %c0_2 = arith.constant 0 : index
    %1 = vector.load %arg3[%c0_1, %c0_2] : memref<1x32xf32, #tpu.memory_space<vmem>>, vector<1x32xf32>
    %c0_3 = arith.constant 0 : index
    %c0_4 = arith.constant 0 : index
    %2 = vector.load %arg4[%c0_3, %c0_4] : memref<1x32xf32, #tpu.memory_space<vmem>>, vector<1x32xf32>
    %c0_5 = arith.constant 0 : index
    %c0_6 = arith.constant 0 : index
    %3 = vector.load %arg5[%c0_5, %c0_6] : memref<1x32xf32, #tpu.memory_space<vmem>>, vector<1x32xf32>
    %c0_7 = arith.constant 0 : index
    %c0_8 = arith.constant 0 : index
    %4 = vector.load %arg8[%c0_7, %c0_8] : memref<1x32xf32, #tpu.memory_space<vmem>>, vector<1x32xf32>
    %c0_9 = arith.constant 0 : index
    %c0_10 = arith.constant 0 : index
    %5 = vector.load %arg9[%c0_9, %c0_10] : memref<1x32xf32, #tpu.memory_space<vmem>>, vector<1x32xf32>
    %c0_11 = arith.constant 0 : index
    %c0_12 = arith.constant 0 : index
    %6 = vector.load %arg10[%c0_11, %c0_12] : memref<1x32xf32, #tpu.memory_space<vmem>>, vector<1x32xf32>
    %c0_13 = arith.constant 0 : index
    %c0_14 = arith.constant 0 : index
    %7 = vector.load %arg2[%c0_13, %c0_14] : memref<20x32xf32, #tpu.memory_space<vmem>>, vector<20x32xf32>
    %cst = arith.constant dense<0.000000e+00> : vector<8x32xf32>
    %8 = tpu.matmul %0, %7, %cst {dimension_numbers = #tpu.dot_dimension_numbers<[1], [0], [0], [1], [0, 0, 1, 1], [], []>} : vector<8x20xf32>, vector<20x32xf32>, vector<8x32xf32> -> vector<8x32xf32>
    %9 = vector.broadcast %1 : vector<1x32xf32> to vector<8x32xf32>
    %10 = arith.addf %8, %9 : vector<8x32xf32>
    %cst_15 = arith.constant dense<0.000000e+00> : vector<8xf32>
    %11 = vector.multi_reduction <add>, %10, %cst_15 [1] : vector<8x32xf32> to vector<8xf32>
    %12 = vector.shape_cast %11 : vector<8xf32> to vector<8x1xf32>
    %cst_16 = arith.constant 3.200000e+01 : f32
    %13 = vector.broadcast %cst_16 : f32 to vector<8x1xf32>
    %14 = arith.divf %12, %13 : vector<8x1xf32>
    %15 = vector.broadcast %14 : vector<8x1xf32> to vector<8x32xf32>
    %16 = arith.subf %10, %15 : vector<8x32xf32>
    %17 = arith.mulf %16, %16 : vector<8x32xf32>
    %cst_17 = arith.constant dense<0.000000e+00> : vector<8xf32>
    %18 = vector.multi_reduction <add>, %17, %cst_17 [1] : vector<8x32xf32> to vector<8xf32>
    %19 = vector.shape_cast %18 : vector<8xf32> to vector<8x1xf32>
    %cst_18 = arith.constant 3.200000e+01 : f32
    %20 = vector.broadcast %cst_18 : f32 to vector<8x1xf32>
    %21 = arith.divf %19, %20 : vector<8x1xf32>
    %cst_19 = arith.constant 3.200000e+01 : f32
    %22 = vector.broadcast %cst_19 : f32 to vector<8x1xf32>
    %23 = arith.addf %21, %22 : vector<8x1xf32>
    %24 = math.rsqrt %23 : vector<8x1xf32>
    %25 = vector.broadcast %24 : vector<8x1xf32> to vector<8x32xf32>
    %26 = arith.mulf %16, %25 : vector<8x32xf32>
    %27 = vector.broadcast %2 : vector<1x32xf32> to vector<8x32xf32>
    %28 = arith.mulf %26, %27 : vector<8x32xf32>
    %29 = vector.broadcast %3 : vector<1x32xf32> to vector<8x32xf32>
    %30 = arith.addf %28, %29 : vector<8x32xf32>
    %cst_20 = arith.constant 0.000000e+00 : f32
    %31 = vector.broadcast %cst_20 : f32 to vector<8x32xf32>
    %32 = arith.maximumf %30, %31 : vector<8x32xf32>
    %c0_21 = arith.constant 0 : index
    %c0_22 = arith.constant 0 : index
    %33 = vector.load %arg6[%c0_21, %c0_22] : memref<32x32xf32, #tpu.memory_space<vmem>>, vector<32x32xf32>
    %cst_23 = arith.constant dense<0.000000e+00> : vector<8x32xf32>
    %34 = tpu.matmul %32, %33, %cst_23 {dimension_numbers = #tpu.dot_dimension_numbers<[1], [0], [0], [1], [0, 0, 1, 1], [], []>} : vector<8x32xf32>, vector<32x32xf32>, vector<8x32xf32> -> vector<8x32xf32>
    %c0_24 = arith.constant 0 : index
    %c0_25 = arith.constant 0 : index
    %35 = vector.load %arg7[%c0_24, %c0_25] : memref<20x32xf32, #tpu.memory_space<vmem>>, vector<20x32xf32>
    %cst_26 = arith.constant dense<0.000000e+00> : vector<8x32xf32>
    %36 = tpu.matmul %0, %35, %cst_26 {dimension_numbers = #tpu.dot_dimension_numbers<[1], [0], [0], [1], [0, 0, 1, 1], [], []>} : vector<8x20xf32>, vector<20x32xf32>, vector<8x32xf32> -> vector<8x32xf32>
    %37 = arith.addf %34, %36 : vector<8x32xf32>
    %38 = vector.broadcast %4 : vector<1x32xf32> to vector<8x32xf32>
    %39 = arith.addf %37, %38 : vector<8x32xf32>
    %cst_27 = arith.constant dense<0.000000e+00> : vector<8xf32>
    %40 = vector.multi_reduction <add>, %39, %cst_27 [1] : vector<8x32xf32> to vector<8xf32>
    %41 = vector.shape_cast %40 : vector<8xf32> to vector<8x1xf32>
    %cst_28 = arith.constant 3.200000e+01 : f32
    %42 = vector.broadcast %cst_28 : f32 to vector<8x1xf32>
    %43 = arith.divf %41, %42 : vector<8x1xf32>
    %44 = vector.broadcast %43 : vector<8x1xf32> to vector<8x32xf32>
    %45 = arith.subf %39, %44 : vector<8x32xf32>
    %46 = arith.mulf %45, %45 : vector<8x32xf32>
    %cst_29 = arith.constant dense<0.000000e+00> : vector<8xf32>
    %47 = vector.multi_reduction <add>, %46, %cst_29 [1] : vector<8x32xf32> to vector<8xf32>
    %48 = vector.shape_cast %47 : vector<8xf32> to vector<8x1xf32>
    %cst_30 = arith.constant 3.200000e+01 : f32
    %49 = vector.broadcast %cst_30 : f32 to vector<8x1xf32>
    %50 = arith.divf %48, %49 : vector<8x1xf32>
    %cst_31 = arith.constant 3.200000e+01 : f32
    %51 = vector.broadcast %cst_31 : f32 to vector<8x1xf32>
    %52 = arith.addf %50, %51 : vector<8x1xf32>
    %53 = math.rsqrt %52 : vector<8x1xf32>
    %54 = vector.broadcast %53 : vector<8x1xf32> to vector<8x32xf32>
    %55 = arith.mulf %45, %54 : vector<8x32xf32>
    %56 = vector.broadcast %5 : vector<1x32xf32> to vector<8x32xf32>
    %57 = arith.mulf %55, %56 : vector<8x32xf32>
    %58 = vector.broadcast %6 : vector<1x32xf32> to vector<8x32xf32>
    %59 = arith.addf %57, %58 : vector<8x32xf32>
    %cst_32 = arith.constant 0.000000e+00 : f32
    %60 = vector.broadcast %cst_32 : f32 to vector<8x32xf32>
    %61 = arith.maximumf %59, %60 : vector<8x32xf32>
    %c0_i32 = arith.constant 0 : i32
    %62 = arith.index_cast %c0_i32 : i32 to index
    %c0_33 = arith.constant 0 : index
    %c0_34 = arith.constant 0 : index
    %63 = vector.load %arg11[%62, %c0_33, %c0_34] : memref<2x32x32xf32, #tpu.memory_space<vmem>>, vector<1x32x32xf32>
    %64 = vector.shape_cast %63 : vector<1x32x32xf32> to vector<32x32xf32>
    %cst_35 = arith.constant dense<0.000000e+00> : vector<8x32xf32>
    %65 = tpu.matmul %61, %64, %cst_35 {dimension_numbers = #tpu.dot_dimension_numbers<[1], [0], [0], [1], [0, 0, 1, 1], [], []>} : vector<8x32xf32>, vector<32x32xf32>, vector<8x32xf32> -> vector<8x32xf32>
    %66 = arith.index_cast %c0_i32 : i32 to index
    %c0_36 = arith.constant 0 : index
    %c0_37 = arith.constant 0 : index
    %67 = vector.load %arg12[%66, %c0_36, %c0_37] : memref<2x1x32xf32, #tpu.memory_space<vmem>>, vector<1x1x32xf32>
    %68 = vector.shape_cast %67 : vector<1x1x32xf32> to vector<1x32xf32>
    %69 = vector.broadcast %68 : vector<1x32xf32> to vector<8x32xf32>
    %70 = arith.addf %65, %69 : vector<8x32xf32>
    %cst_38 = arith.constant 0.000000e+00 : f32
    %71 = vector.broadcast %cst_38 : f32 to vector<8x32xf32>
    %72 = arith.maximumf %70, %71 : vector<8x32xf32>
    %73 = arith.index_cast %c0_i32 : i32 to index
    %c0_39 = arith.constant 0 : index
    %c0_40 = arith.constant 0 : index
    %74 = vector.load %arg13[%73, %c0_39, %c0_40] : memref<2x1x32xf32, #tpu.memory_space<vmem>>, vector<1x1x32xf32>
    %75 = vector.shape_cast %74 : vector<1x1x32xf32> to vector<1x32xf32>
    %76 = arith.index_cast %c0_i32 : i32 to index
    %c0_41 = arith.constant 0 : index
    %c0_42 = arith.constant 0 : index
    %77 = vector.load %arg14[%76, %c0_41, %c0_42] : memref<2x1x32xf32, #tpu.memory_space<vmem>>, vector<1x1x32xf32>
    %78 = vector.shape_cast %77 : vector<1x1x32xf32> to vector<1x32xf32>
    %cst_43 = arith.constant dense<0.000000e+00> : vector<8xf32>
    %79 = vector.multi_reduction <add>, %72, %cst_43 [1] : vector<8x32xf32> to vector<8xf32>
    %80 = vector.shape_cast %79 : vector<8xf32> to vector<8x1xf32>
    %cst_44 = arith.constant 3.200000e+01 : f32
    %81 = vector.broadcast %cst_44 : f32 to vector<8x1xf32>
    %82 = arith.divf %80, %81 : vector<8x1xf32>
    %83 = vector.broadcast %82 : vector<8x1xf32> to vector<8x32xf32>
    %84 = arith.subf %72, %83 : vector<8x32xf32>
    %85 = arith.mulf %84, %84 : vector<8x32xf32>
    %cst_45 = arith.constant dense<0.000000e+00> : vector<8xf32>
    %86 = vector.multi_reduction <add>, %85, %cst_45 [1] : vector<8x32xf32> to vector<8xf32>
    %87 = vector.shape_cast %86 : vector<8xf32> to vector<8x1xf32>
    %cst_46 = arith.constant 3.200000e+01 : f32
    %88 = vector.broadcast %cst_46 : f32 to vector<8x1xf32>
    %89 = arith.divf %87, %88 : vector<8x1xf32>
    %cst_47 = arith.constant 3.200000e+01 : f32
    %90 = vector.broadcast %cst_47 : f32 to vector<8x1xf32>
    %91 = arith.addf %89, %90 : vector<8x1xf32>
    %92 = math.rsqrt %91 : vector<8x1xf32>
    %93 = vector.broadcast %92 : vector<8x1xf32> to vector<8x32xf32>
    %94 = arith.mulf %84, %93 : vector<8x32xf32>
    %95 = vector.broadcast %75 : vector<1x32xf32> to vector<8x32xf32>
    %96 = arith.mulf %94, %95 : vector<8x32xf32>
    %97 = vector.broadcast %78 : vector<1x32xf32> to vector<8x32xf32>
    %98 = arith.addf %96, %97 : vector<8x32xf32>
    %cst_48 = arith.constant 0.000000e+00 : f32
    %99 = vector.broadcast %cst_48 : f32 to vector<8x32xf32>
    %100 = arith.maximumf %98, %99 : vector<8x32xf32>
    %c1_i32 = arith.constant 1 : i32
    %101 = arith.index_cast %c1_i32 : i32 to index
    %c0_49 = arith.constant 0 : index
    %c0_50 = arith.constant 0 : index
    %102 = vector.load %arg11[%101, %c0_49, %c0_50] : memref<2x32x32xf32, #tpu.memory_space<vmem>>, vector<1x32x32xf32>
    %103 = vector.shape_cast %102 : vector<1x32x32xf32> to vector<32x32xf32>
    %cst_51 = arith.constant dense<0.000000e+00> : vector<8x32xf32>
    %104 = tpu.matmul %100, %103, %cst_51 {dimension_numbers = #tpu.dot_dimension_numbers<[1], [0], [0], [1], [0, 0, 1, 1], [], []>} : vector<8x32xf32>, vector<32x32xf32>, vector<8x32xf32> -> vector<8x32xf32>
    %105 = arith.index_cast %c1_i32 : i32 to index
    %c0_52 = arith.constant 0 : index
    %c0_53 = arith.constant 0 : index
    %106 = vector.load %arg12[%105, %c0_52, %c0_53] : memref<2x1x32xf32, #tpu.memory_space<vmem>>, vector<1x1x32xf32>
    %107 = vector.shape_cast %106 : vector<1x1x32xf32> to vector<1x32xf32>
    %108 = vector.broadcast %107 : vector<1x32xf32> to vector<8x32xf32>
    %109 = arith.addf %104, %108 : vector<8x32xf32>
    %cst_54 = arith.constant 0.000000e+00 : f32
    %110 = vector.broadcast %cst_54 : f32 to vector<8x32xf32>
    %111 = arith.maximumf %109, %110 : vector<8x32xf32>
    %112 = arith.index_cast %c1_i32 : i32 to index
    %c0_55 = arith.constant 0 : index
    %c0_56 = arith.constant 0 : index
    %113 = vector.load %arg13[%112, %c0_55, %c0_56] : memref<2x1x32xf32, #tpu.memory_space<vmem>>, vector<1x1x32xf32>
    %114 = vector.shape_cast %113 : vector<1x1x32xf32> to vector<1x32xf32>
    %115 = arith.index_cast %c1_i32 : i32 to index
    %c0_57 = arith.constant 0 : index
    %c0_58 = arith.constant 0 : index
    %116 = vector.load %arg14[%115, %c0_57, %c0_58] : memref<2x1x32xf32, #tpu.memory_space<vmem>>, vector<1x1x32xf32>
    %117 = vector.shape_cast %116 : vector<1x1x32xf32> to vector<1x32xf32>
    %cst_59 = arith.constant dense<0.000000e+00> : vector<8xf32>
    %118 = vector.multi_reduction <add>, %111, %cst_59 [1] : vector<8x32xf32> to vector<8xf32>
    %119 = vector.shape_cast %118 : vector<8xf32> to vector<8x1xf32>
    %cst_60 = arith.constant 3.200000e+01 : f32
    %120 = vector.broadcast %cst_60 : f32 to vector<8x1xf32>
    %121 = arith.divf %119, %120 : vector<8x1xf32>
    %122 = vector.broadcast %121 : vector<8x1xf32> to vector<8x32xf32>
    %123 = arith.subf %111, %122 : vector<8x32xf32>
    %124 = arith.mulf %123, %123 : vector<8x32xf32>
    %cst_61 = arith.constant dense<0.000000e+00> : vector<8xf32>
    %125 = vector.multi_reduction <add>, %124, %cst_61 [1] : vector<8x32xf32> to vector<8xf32>
    %126 = vector.shape_cast %125 : vector<8xf32> to vector<8x1xf32>
    %cst_62 = arith.constant 3.200000e+01 : f32
    %127 = vector.broadcast %cst_62 : f32 to vector<8x1xf32>
    %128 = arith.divf %126, %127 : vector<8x1xf32>
    %cst_63 = arith.constant 3.200000e+01 : f32
    %129 = vector.broadcast %cst_63 : f32 to vector<8x1xf32>
    %130 = arith.addf %128, %129 : vector<8x1xf32>
    %131 = math.rsqrt %130 : vector<8x1xf32>
    %132 = vector.broadcast %131 : vector<8x1xf32> to vector<8x32xf32>
    %133 = arith.mulf %123, %132 : vector<8x32xf32>
    %134 = vector.broadcast %114 : vector<1x32xf32> to vector<8x32xf32>
    %135 = arith.mulf %133, %134 : vector<8x32xf32>
    %136 = vector.broadcast %117 : vector<1x32xf32> to vector<8x32xf32>
    %137 = arith.addf %135, %136 : vector<8x32xf32>
    %cst_64 = arith.constant 0.000000e+00 : f32
    %138 = vector.broadcast %cst_64 : f32 to vector<8x32xf32>
    %139 = arith.maximumf %137, %138 : vector<8x32xf32>
    %c2_i32 = arith.constant 2 : i32
    %c0_65 = arith.constant 0 : index
    %c0_66 = arith.constant 0 : index
    %140 = vector.load %arg15[%c0_65, %c0_66] : memref<1x32xf32, #tpu.memory_space<vmem>>, vector<1x32xf32>
    %cst_67 = arith.constant dense<0.000000e+00> : vector<1x8xf32>
    %141 = tpu.matmul %140, %139, %cst_67 {dimension_numbers = #tpu.dot_dimension_numbers<[1], [1], [0], [0], [0, 0, 1, 0], [], []>} : vector<1x32xf32>, vector<8x32xf32>, vector<1x8xf32> -> vector<1x8xf32>
    %c0_68 = arith.constant 0 : index
    %c0_69 = arith.constant 0 : index
    %142 = vector.load %arg16[%c0_68, %c0_69] : memref<1x1xf32, #tpu.memory_space<vmem>>, vector<1x1xf32>
    %143 = vector.broadcast %142 : vector<1x1xf32> to vector<1x8xf32>
    %144 = arith.addf %141, %143 : vector<1x8xf32>
    %145 = vector.shape_cast %144 : vector<1x8xf32> to vector<1x1x8xf32>
    %c0_70 = arith.constant 0 : index
    %c0_71 = arith.constant 0 : index
    %c0_72 = arith.constant 0 : index
    %146 = vector.load %arg17[%c0_70, %c0_71, %c0_72] : memref<1x1x8xf32, #tpu.memory_space<vmem>>, vector<1x1x8xf32>
    tpu.vector_store %arg17[%c0_70, %c0_71, %c0_72], %145 {strides = array<i32>} : memref<1x1x8xf32, #tpu.memory_space<vmem>>, vector<1x1x8xf32>,
    return
  }
  func.func @transform_0(%arg0: i32) -> (i32, i32) {
    %c0_i32 = arith.constant 0 : i32
    %c0_i32_0 = arith.constant 0 : i32
    return %arg0, %c0_i32 : i32, i32
  }
  func.func @transform_1(%arg0: i32) -> (i32, i32) {
    %c0_i32 = arith.constant 0 : i32
    %c0_i32_0 = arith.constant 0 : i32
    %c0_i32_1 = arith.constant 0 : i32
    return %c0_i32, %c0_i32_0 : i32, i32
  }
  func.func @transform_2(%arg0: i32) -> (i32, i32) {
    %c0_i32 = arith.constant 0 : i32
    %c0_i32_0 = arith.constant 0 : i32
    %c0_i32_1 = arith.constant 0 : i32
    return %c0_i32, %c0_i32_0 : i32, i32
  }
  func.func @transform_3(%arg0: i32) -> (i32, i32) {
    %c0_i32 = arith.constant 0 : i32
    %c0_i32_0 = arith.constant 0 : i32
    %c0_i32_1 = arith.constant 0 : i32
    return %c0_i32, %c0_i32_0 : i32, i32
  }
  func.func @transform_4(%arg0: i32) -> (i32, i32) {
    %c0_i32 = arith.constant 0 : i32
    %c0_i32_0 = arith.constant 0 : i32
    %c0_i32_1 = arith.constant 0 : i32
    return %c0_i32, %c0_i32_0 : i32, i32
  }
  func.func @transform_5(%arg0: i32) -> (i32, i32) {
    %c0_i32 = arith.constant 0 : i32
    %c0_i32_0 = arith.constant 0 : i32
    %c0_i32_1 = arith.constant 0 : i32
    return %c0_i32, %c0_i32_0 : i32, i32
  }
  func.func @transform_6(%arg0: i32) -> (i32, i32) {
    %c0_i32 = arith.constant 0 : i32
    %c0_i32_0 = arith.constant 0 : i32
    %c0_i32_1 = arith.constant 0 : i32
    return %c0_i32, %c0_i32_0 : i32, i32
  }
  func.func @transform_7(%arg0: i32) -> (i32, i32) {
    %c0_i32 = arith.constant 0 : i32
    %c0_i32_0 = arith.constant 0 : i32
    %c0_i32_1 = arith.constant 0 : i32
    return %c0_i32, %c0_i32_0 : i32, i32
  }
  func.func @transform_8(%arg0: i32) -> (i32, i32) {
    %c0_i32 = arith.constant 0 : i32
    %c0_i32_0 = arith.constant 0 : i32
    %c0_i32_1 = arith.constant 0 : i32
    return %c0_i32, %c0_i32_0 : i32, i32
  }
  func.func @transform_9(%arg0: i32) -> (i32, i32) {
    %c0_i32 = arith.constant 0 : i32
    %c0_i32_0 = arith.constant 0 : i32
    %c0_i32_1 = arith.constant 0 : i32
    return %c0_i32, %c0_i32_0 : i32, i32
  }
  func.func @transform_10(%arg0: i32) -> (i32, i32, i32) {
    %c0_i32 = arith.constant 0 : i32
    %c0_i32_0 = arith.constant 0 : i32
    %c0_i32_1 = arith.constant 0 : i32
    %c0_i32_2 = arith.constant 0 : i32
    return %c0_i32, %c0_i32_0, %c0_i32_1 : i32, i32, i32
  }
  func.func @transform_11(%arg0: i32) -> (i32, i32, i32) {
    %c0_i32 = arith.constant 0 : i32
    %c0_i32_0 = arith.constant 0 : i32
    %c0_i32_1 = arith.constant 0 : i32
    %c0_i32_2 = arith.constant 0 : i32
    return %c0_i32, %c0_i32_0, %c0_i32_1 : i32, i32, i32
  }
  func.func @transform_12(%arg0: i32) -> (i32, i32, i32) {
    %c0_i32 = arith.constant 0 : i32
    %c0_i32_0 = arith.constant 0 : i32
    %c0_i32_1 = arith.constant 0 : i32
    %c0_i32_2 = arith.constant 0 : i32
    return %c0_i32, %c0_i32_0, %c0_i32_1 : i32, i32, i32
  }
  func.func @transform_13(%arg0: i32) -> (i32, i32, i32) {
    %c0_i32 = arith.constant 0 : i32
    %c0_i32_0 = arith.constant 0 : i32
    %c0_i32_1 = arith.constant 0 : i32
    %c0_i32_2 = arith.constant 0 : i32
    return %c0_i32, %c0_i32_0, %c0_i32_1 : i32, i32, i32
  }
  func.func @transform_14(%arg0: i32) -> (i32, i32) {
    %c0_i32 = arith.constant 0 : i32
    %c0_i32_0 = arith.constant 0 : i32
    %c0_i32_1 = arith.constant 0 : i32
    return %c0_i32, %c0_i32_0 : i32, i32
  }
  func.func @transform_15(%arg0: i32) -> (i32, i32) {
    %c0_i32 = arith.constant 0 : i32
    %c0_i32_0 = arith.constant 0 : i32
    %c0_i32_1 = arith.constant 0 : i32
    return %c0_i32, %c0_i32_0 : i32, i32
  }
  func.func @transform_16(%arg0: i32) -> (i32, i32, i32) {
    %c0_i32 = arith.constant 0 : i32
    %c0_i32_0 = arith.constant 0 : i32
    %c0_i32_1 = arith.constant 0 : i32
    return %arg0, %c0_i32, %c0_i32_0 : i32, i32, i32
  }
}

module attributes {stable_mosaic.version = 11 : i64} {
  func.func @_critic_kernel(%arg0: i32, %arg1: memref<8x20xf32, #tpu.memory_space<vmem>>, %arg2: memref<20x32xf32, #tpu.memory_space<vmem>>, %arg3: memref<1x32xf32, #tpu.memory_space<vmem>>, %arg4: memref<1x32xf32, #tpu.memory_space<vmem>>, %arg5: memref<1x32xf32, #tpu.memory_space<vmem>>, %arg6: memref<32x32xf32, #tpu.memory_space<vmem>>, %arg7: memref<20x32xf32, #tpu.memory_space<vmem>>, %arg8: memref<1x32xf32, #tpu.memory_space<vmem>>, %arg9: memref<1x32xf32, #tpu.memory_space<vmem>>, %arg10: memref<1x32xf32, #tpu.memory_space<vmem>>, %arg11: memref<2x32x32xf32, #tpu.memory_space<vmem>>, %arg12: memref<2x1x32xf32, #tpu.memory_space<vmem>>, %arg13: memref<2x1x32xf32, #tpu.memory_space<vmem>>, %arg14: memref<2x1x32xf32, #tpu.memory_space<vmem>>, %arg15: memref<1x32xf32, #tpu.memory_space<vmem>>, %arg16: memref<1x1xf32, #tpu.memory_space<vmem>>, %arg17: memref<1x1x8xf32, #tpu.memory_space<vmem>>) attributes {dimension_semantics = [#tpu.dimension_semantics<parallel>], iteration_bounds = array<i64: 1>, scalar_prefetch = 0 : i64, scratch_operands = 0 : i64, tpu.core_type = #tpu.core_type<tc>, window_params = [{transform_indices = @transform_0, window_bounds = array<i64: 8, 20>}, {pipeline_mode = #tpu.pipeline_mode<synchronous>, transform_indices = @transform_1, window_bounds = array<i64: 20, 32>}, {pipeline_mode = #tpu.pipeline_mode<synchronous>, transform_indices = @transform_2, window_bounds = array<i64: 1, 32>}, {pipeline_mode = #tpu.pipeline_mode<synchronous>, transform_indices = @transform_3, window_bounds = array<i64: 1, 32>}, {pipeline_mode = #tpu.pipeline_mode<synchronous>, transform_indices = @transform_4, window_bounds = array<i64: 1, 32>}, {pipeline_mode = #tpu.pipeline_mode<synchronous>, transform_indices = @transform_5, window_bounds = array<i64: 32, 32>}, {pipeline_mode = #tpu.pipeline_mode<synchronous>, transform_indices = @transform_6, window_bounds = array<i64: 20, 32>}, {pipeline_mode = #tpu.pipeline_mode<synchronous>, transform_indices = @transform_7, window_bounds = array<i64: 1, 32>}, {pipeline_mode = #tpu.pipeline_mode<synchronous>, transform_indices = @transform_8, window_bounds = array<i64: 1, 32>}, {pipeline_mode = #tpu.pipeline_mode<synchronous>, transform_indices = @transform_9, window_bounds = array<i64: 1, 32>}, {pipeline_mode = #tpu.pipeline_mode<synchronous>, transform_indices = @transform_10, window_bounds = array<i64: 2, 32, 32>}, {pipeline_mode = #tpu.pipeline_mode<synchronous>, transform_indices = @transform_11, window_bounds = array<i64: 2, 1, 32>}, {pipeline_mode = #tpu.pipeline_mode<synchronous>, transform_indices = @transform_12, window_bounds = array<i64: 2, 1, 32>}, {pipeline_mode = #tpu.pipeline_mode<synchronous>, transform_indices = @transform_13, window_bounds = array<i64: 2, 1, 32>}, {pipeline_mode = #tpu.pipeline_mode<synchronous>, transform_indices = @transform_14, window_bounds = array<i64: 1, 32>}, {pipeline_mode = #tpu.pipeline_mode<synchronous>, transform_indices = @transform_15, window_bounds = array<i64: 1, 1>}, {transform_indices = @transform_16, window_bounds = array<i64: 1, 1, 8>}]} {
    %c0 = arith.constant 0 : index
    %c0_0 = arith.constant 0 : index
    %0 = vector.load %arg1[%c0, %c0_0] : memref<8x20xf32, #tpu.memory_space<vmem>>, vector<8x20xf32>
    %c0_1 = arith.constant 0 : index
    %c0_2 = arith.constant 0 : index
    %1 = vector.load %arg3[%c0_1, %c0_2] : memref<1x32xf32, #tpu.memory_space<vmem>>, vector<1x32xf32>
    %c0_3 = arith.constant 0 : index
    %c0_4 = arith.constant 0 : index
    %2 = vector.load %arg4[%c0_3, %c0_4] : memref<1x32xf32, #tpu.memory_space<vmem>>, vector<1x32xf32>
    %c0_5 = arith.constant 0 : index
    %c0_6 = arith.constant 0 : index
    %3 = vector.load %arg5[%c0_5, %c0_6] : memref<1x32xf32, #tpu.memory_space<vmem>>, vector<1x32xf32>
    %c0_7 = arith.constant 0 : index
    %c0_8 = arith.constant 0 : index
    %4 = vector.load %arg8[%c0_7, %c0_8] : memref<1x32xf32, #tpu.memory_space<vmem>>, vector<1x32xf32>
    %c0_9 = arith.constant 0 : index
    %c0_10 = arith.constant 0 : index
    %5 = vector.load %arg9[%c0_9, %c0_10] : memref<1x32xf32, #tpu.memory_space<vmem>>, vector<1x32xf32>
    %c0_11 = arith.constant 0 : index
    %c0_12 = arith.constant 0 : index
    %6 = vector.load %arg10[%c0_11, %c0_12] : memref<1x32xf32, #tpu.memory_space<vmem>>, vector<1x32xf32>
    %c0_13 = arith.constant 0 : index
    %c0_14 = arith.constant 0 : index
    %7 = vector.load %arg2[%c0_13, %c0_14] : memref<20x32xf32, #tpu.memory_space<vmem>>, vector<20x32xf32>
    %cst = arith.constant dense<0.000000e+00> : vector<8x32xf32>
    %8 = tpu.matmul %0, %7, %cst {dimension_numbers = #tpu.dot_dimension_numbers<[1], [0], [0], [1], [0, 0, 1, 1], [], []>} : vector<8x20xf32>, vector<20x32xf32>, vector<8x32xf32> -> vector<8x32xf32>
    %9 = vector.broadcast %1 : vector<1x32xf32> to vector<8x32xf32>
    %10 = arith.addf %8, %9 : vector<8x32xf32>
    %cst_15 = arith.constant dense<0.000000e+00> : vector<8xf32>
    %11 = vector.multi_reduction <add>, %10, %cst_15 [1] : vector<8x32xf32> to vector<8xf32>
    %12 = vector.shape_cast %11 : vector<8xf32> to vector<8x1xf32>
    %cst_16 = arith.constant 3.200000e+01 : f32
    %13 = vector.broadcast %cst_16 : f32 to vector<8x1xf32>
    %14 = arith.divf %12, %13 : vector<8x1xf32>
    %15 = vector.broadcast %14 : vector<8x1xf32> to vector<8x32xf32>
    %16 = arith.subf %10, %15 : vector<8x32xf32>
    %17 = arith.mulf %16, %16 : vector<8x32xf32>
    %cst_17 = arith.constant dense<0.000000e+00> : vector<8xf32>
    %18 = vector.multi_reduction <add>, %17, %cst_17 [1] : vector<8x32xf32> to vector<8xf32>
    %19 = vector.shape_cast %18 : vector<8xf32> to vector<8x1xf32>
    %cst_18 = arith.constant 3.200000e+01 : f32
    %20 = vector.broadcast %cst_18 : f32 to vector<8x1xf32>
    %21 = arith.divf %19, %20 : vector<8x1xf32>
    %cst_19 = arith.constant 3.200000e+01 : f32
    %22 = vector.broadcast %cst_19 : f32 to vector<8x1xf32>
    %23 = arith.addf %21, %22 : vector<8x1xf32>
    %24 = math.rsqrt %23 : vector<8x1xf32>
    %25 = vector.broadcast %24 : vector<8x1xf32> to vector<8x32xf32>
    %26 = arith.mulf %16, %25 : vector<8x32xf32>
    %27 = vector.broadcast %2 : vector<1x32xf32> to vector<8x32xf32>
    %28 = arith.mulf %26, %27 : vector<8x32xf32>
    %29 = vector.broadcast %3 : vector<1x32xf32> to vector<8x32xf32>
    %30 = arith.addf %28, %29 : vector<8x32xf32>
    %cst_20 = arith.constant 0.000000e+00 : f32
    %31 = vector.broadcast %cst_20 : f32 to vector<8x32xf32>
    %32 = arith.maximumf %30, %31 : vector<8x32xf32>
    %c0_21 = arith.constant 0 : index
    %c0_22 = arith.constant 0 : index
    %33 = vector.load %arg6[%c0_21, %c0_22] : memref<32x32xf32, #tpu.memory_space<vmem>>, vector<32x32xf32>
    %cst_23 = arith.constant dense<0.000000e+00> : vector<8x32xf32>
    %34 = tpu.matmul %32, %33, %cst_23 {dimension_numbers = #tpu.dot_dimension_numbers<[1], [0], [0], [1], [0, 0, 1, 1], [], []>} : vector<8x32xf32>, vector<32x32xf32>, vector<8x32xf32> -> vector<8x32xf32>
    %c0_24 = arith.constant 0 : index
    %c0_25 = arith.constant 0 : index
    %35 = vector.load %arg7[%c0_24, %c0_25] : memref<20x32xf32, #tpu.memory_space<vmem>>, vector<20x32xf32>
    %cst_26 = arith.constant dense<0.000000e+00> : vector<8x32xf32>
    %36 = tpu.matmul %0, %35, %cst_26 {dimension_numbers = #tpu.dot_dimension_numbers<[1], [0], [0], [1], [0, 0, 1, 1], [], []>} : vector<8x20xf32>, vector<20x32xf32>, vector<8x32xf32> -> vector<8x32xf32>
    %37 = arith.addf %34, %36 : vector<8x32xf32>
    %38 = vector.broadcast %4 : vector<1x32xf32> to vector<8x32xf32>
    %39 = arith.addf %37, %38 : vector<8x32xf32>
    %cst_27 = arith.constant dense<0.000000e+00> : vector<8xf32>
    %40 = vector.multi_reduction <add>, %39, %cst_27 [1] : vector<8x32xf32> to vector<8xf32>
    %41 = vector.shape_cast %40 : vector<8xf32> to vector<8x1xf32>
    %cst_28 = arith.constant 3.200000e+01 : f32
    %42 = vector.broadcast %cst_28 : f32 to vector<8x1xf32>
    %43 = arith.divf %41, %42 : vector<8x1xf32>
    %44 = vector.broadcast %43 : vector<8x1xf32> to vector<8x32xf32>
    %45 = arith.subf %39, %44 : vector<8x32xf32>
    %46 = arith.mulf %45, %45 : vector<8x32xf32>
    %cst_29 = arith.constant dense<0.000000e+00> : vector<8xf32>
    %47 = vector.multi_reduction <add>, %46, %cst_29 [1] : vector<8x32xf32> to vector<8xf32>
    %48 = vector.shape_cast %47 : vector<8xf32> to vector<8x1xf32>
    %cst_30 = arith.constant 3.200000e+01 : f32
    %49 = vector.broadcast %cst_30 : f32 to vector<8x1xf32>
    %50 = arith.divf %48, %49 : vector<8x1xf32>
    %cst_31 = arith.constant 3.200000e+01 : f32
    %51 = vector.broadcast %cst_31 : f32 to vector<8x1xf32>
    %52 = arith.addf %50, %51 : vector<8x1xf32>
    %53 = math.rsqrt %52 : vector<8x1xf32>
    %54 = vector.broadcast %53 : vector<8x1xf32> to vector<8x32xf32>
    %55 = arith.mulf %45, %54 : vector<8x32xf32>
    %56 = vector.broadcast %5 : vector<1x32xf32> to vector<8x32xf32>
    %57 = arith.mulf %55, %56 : vector<8x32xf32>
    %58 = vector.broadcast %6 : vector<1x32xf32> to vector<8x32xf32>
    %59 = arith.addf %57, %58 : vector<8x32xf32>
    %cst_32 = arith.constant 0.000000e+00 : f32
    %60 = vector.broadcast %cst_32 : f32 to vector<8x32xf32>
    %61 = arith.maximumf %59, %60 : vector<8x32xf32>
    %c0_i32 = arith.constant 0 : i32
    %62 = arith.index_cast %c0_i32 : i32 to index
    %c0_33 = arith.constant 0 : index
    %c0_34 = arith.constant 0 : index
    %63 = vector.load %arg11[%62, %c0_33, %c0_34] : memref<2x32x32xf32, #tpu.memory_space<vmem>>, vector<1x32x32xf32>
    %64 = vector.shape_cast %63 : vector<1x32x32xf32> to vector<32x32xf32>
    %cst_35 = arith.constant dense<0.000000e+00> : vector<8x32xf32>
    %65 = tpu.matmul %61, %64, %cst_35 {dimension_numbers = #tpu.dot_dimension_numbers<[1], [0], [0], [1], [0, 0, 1, 1], [], []>} : vector<8x32xf32>, vector<32x32xf32>, vector<8x32xf32> -> vector<8x32xf32>
    %66 = arith.index_cast %c0_i32 : i32 to index
    %c0_36 = arith.constant 0 : index
    %c0_37 = arith.constant 0 : index
    %67 = vector.load %arg12[%66, %c0_36, %c0_37] : memref<2x1x32xf32, #tpu.memory_space<vmem>>, vector<1x1x32xf32>
    %68 = vector.shape_cast %67 : vector<1x1x32xf32> to vector<1x32xf32>
    %69 = vector.broadcast %68 : vector<1x32xf32> to vector<8x32xf32>
    %70 = arith.addf %65, %69 : vector<8x32xf32>
    %cst_38 = arith.constant 0.000000e+00 : f32
    %71 = vector.broadcast %cst_38 : f32 to vector<8x32xf32>
    %72 = arith.maximumf %70, %71 : vector<8x32xf32>
    %73 = arith.index_cast %c0_i32 : i32 to index
    %c0_39 = arith.constant 0 : index
    %c0_40 = arith.constant 0 : index
    %74 = vector.load %arg13[%73, %c0_39, %c0_40] : memref<2x1x32xf32, #tpu.memory_space<vmem>>, vector<1x1x32xf32>
    %75 = vector.shape_cast %74 : vector<1x1x32xf32> to vector<1x32xf32>
    %76 = arith.index_cast %c0_i32 : i32 to index
    %c0_41 = arith.constant 0 : index
    %c0_42 = arith.constant 0 : index
    %77 = vector.load %arg14[%76, %c0_41, %c0_42] : memref<2x1x32xf32, #tpu.memory_space<vmem>>, vector<1x1x32xf32>
    %78 = vector.shape_cast %77 : vector<1x1x32xf32> to vector<1x32xf32>
    %cst_43 = arith.constant dense<0.000000e+00> : vector<8xf32>
    %79 = vector.multi_reduction <add>, %72, %cst_43 [1] : vector<8x32xf32> to vector<8xf32>
    %80 = vector.shape_cast %79 : vector<8xf32> to vector<8x1xf32>
    %cst_44 = arith.constant 3.200000e+01 : f32
    %81 = vector.broadcast %cst_44 : f32 to vector<8x1xf32>
    %82 = arith.divf %80, %81 : vector<8x1xf32>
    %83 = vector.broadcast %82 : vector<8x1xf32> to vector<8x32xf32>
    %84 = arith.subf %72, %83 : vector<8x32xf32>
    %85 = arith.mulf %84, %84 : vector<8x32xf32>
    %cst_45 = arith.constant dense<0.000000e+00> : vector<8xf32>
    %86 = vector.multi_reduction <add>, %85, %cst_45 [1] : vector<8x32xf32> to vector<8xf32>
    %87 = vector.shape_cast %86 : vector<8xf32> to vector<8x1xf32>
    %cst_46 = arith.constant 3.200000e+01 : f32
    %88 = vector.broadcast %cst_46 : f32 to vector<8x1xf32>
    %89 = arith.divf %87, %88 : vector<8x1xf32>
    %cst_47 = arith.constant 3.200000e+01 : f32
    %90 = vector.broadcast %cst_47 : f32 to vector<8x1xf32>
    %91 = arith.addf %89, %90 : vector<8x1xf32>
    %92 = math.rsqrt %91 : vector<8x1xf32>
    %93 = vector.broadcast %92 : vector<8x1xf32> to vector<8x32xf32>
    %94 = arith.mulf %84, %93 : vector<8x32xf32>
    %95 = vector.broadcast %75 : vector<1x32xf32> to vector<8x32xf32>
    %96 = arith.mulf %94, %95 : vector<8x32xf32>
    %97 = vector.broadcast %78 : vector<1x32xf32> to vector<8x32xf32>
    %98 = arith.addf %96, %97 : vector<8x32xf32>
    %cst_48 = arith.constant 0.000000e+00 : f32
    %99 = vector.broadcast %cst_48 : f32 to vector<8x32xf32>
    %100 = arith.maximumf %98, %99 : vector<8x32xf32>
    %c1_i32 = arith.constant 1 : i32
    %101 = arith.index_cast %c1_i32 : i32 to index
    %c0_49 = arith.constant 0 : index
    %c0_50 = arith.constant 0 : index
    %102 = vector.load %arg11[%101, %c0_49, %c0_50] : memref<2x32x32xf32, #tpu.memory_space<vmem>>, vector<1x32x32xf32>
    %103 = vector.shape_cast %102 : vector<1x32x32xf32> to vector<32x32xf32>
    %cst_51 = arith.constant dense<0.000000e+00> : vector<8x32xf32>
    %104 = tpu.matmul %100, %103, %cst_51 {dimension_numbers = #tpu.dot_dimension_numbers<[1], [0], [0], [1], [0, 0, 1, 1], [], []>} : vector<8x32xf32>, vector<32x32xf32>, vector<8x32xf32> -> vector<8x32xf32>
    %105 = arith.index_cast %c1_i32 : i32 to index
    %c0_52 = arith.constant 0 : index
    %c0_53 = arith.constant 0 : index
    %106 = vector.load %arg12[%105, %c0_52, %c0_53] : memref<2x1x32xf32, #tpu.memory_space<vmem>>, vector<1x1x32xf32>
    %107 = vector.shape_cast %106 : vector<1x1x32xf32> to vector<1x32xf32>
    %108 = vector.broadcast %107 : vector<1x32xf32> to vector<8x32xf32>
    %109 = arith.addf %104, %108 : vector<8x32xf32>
    %cst_54 = arith.constant 0.000000e+00 : f32
    %110 = vector.broadcast %cst_54 : f32 to vector<8x32xf32>
    %111 = arith.maximumf %109, %110 : vector<8x32xf32>
    %112 = arith.index_cast %c1_i32 : i32 to index
    %c0_55 = arith.constant 0 : index
    %c0_56 = arith.constant 0 : index
    %113 = vector.load %arg13[%112, %c0_55, %c0_56] : memref<2x1x32xf32, #tpu.memory_space<vmem>>, vector<1x1x32xf32>
    %114 = vector.shape_cast %113 : vector<1x1x32xf32> to vector<1x32xf32>
    %115 = arith.index_cast %c1_i32 : i32 to index
    %c0_57 = arith.constant 0 : index
    %c0_58 = arith.constant 0 : index
    %116 = vector.load %arg14[%115, %c0_57, %c0_58] : memref<2x1x32xf32, #tpu.memory_space<vmem>>, vector<1x1x32xf32>
    %117 = vector.shape_cast %116 : vector<1x1x32xf32> to vector<1x32xf32>
    %cst_59 = arith.constant dense<0.000000e+00> : vector<8xf32>
    %118 = vector.multi_reduction <add>, %111, %cst_59 [1] : vector<8x32xf32> to vector<8xf32>
    %119 = vector.shape_cast %118 : vector<8xf32> to vector<8x1xf32>
    %cst_60 = arith.constant 3.200000e+01 : f32
    %120 = vector.broadcast %cst_60 : f32 to vector<8x1xf32>
    %121 = arith.divf %119, %120 : vector<8x1xf32>
    %122 = vector.broadcast %121 : vector<8x1xf32> to vector<8x32xf32>
    %123 = arith.subf %111, %122 : vector<8x32xf32>
    %124 = arith.mulf %123, %123 : vector<8x32xf32>
    %cst_61 = arith.constant dense<0.000000e+00> : vector<8xf32>
    %125 = vector.multi_reduction <add>, %124, %cst_61 [1] : vector<8x32xf32> to vector<8xf32>
    %126 = vector.shape_cast %125 : vector<8xf32> to vector<8x1xf32>
    %cst_62 = arith.constant 3.200000e+01 : f32
    %127 = vector.broadcast %cst_62 : f32 to vector<8x1xf32>
    %128 = arith.divf %126, %127 : vector<8x1xf32>
    %cst_63 = arith.constant 3.200000e+01 : f32
    %129 = vector.broadcast %cst_63 : f32 to vector<8x1xf32>
    %130 = arith.addf %128, %129 : vector<8x1xf32>
    %131 = math.rsqrt %130 : vector<8x1xf32>
    %132 = vector.broadcast %131 : vector<8x1xf32> to vector<8x32xf32>
    %133 = arith.mulf %123, %132 : vector<8x32xf32>
    %134 = vector.broadcast %114 : vector<1x32xf32> to vector<8x32xf32>
    %135 = arith.mulf %133, %134 : vector<8x32xf32>
    %136 = vector.broadcast %117 : vector<1x32xf32> to vector<8x32xf32>
    %137 = arith.addf %135, %136 : vector<8x32xf32>
    %cst_64 = arith.constant 0.000000e+00 : f32
    %138 = vector.broadcast %cst_64 : f32 to vector<8x32xf32>
    %139 = arith.maximumf %137, %138 : vector<8x32xf32>
    %c2_i32 = arith.constant 2 : i32
    %c0_65 = arith.constant 0 : index
    %c0_66 = arith.constant 0 : index
    %140 = vector.load %arg15[%c0_65, %c0_66] : memref<1x32xf32, #tpu.memory_space<vmem>>, vector<1x32xf32>
    %cst_67 = arith.constant dense<0.000000e+00> : vector<1x8xf32>
    %141 = tpu.matmul %140, %139, %cst_67 {dimension_numbers = #tpu.dot_dimension_numbers<[1], [1], [0], [0], [0, 0, 1, 0], [], []>} : vector<1x32xf32>, vector<8x32xf32>, vector<1x8xf32> -> vector<1x8xf32>
    %c0_68 = arith.constant 0 : index
    %c0_69 = arith.constant 0 : index
    %142 = vector.load %arg16[%c0_68, %c0_69] : memref<1x1xf32, #tpu.memory_space<vmem>>, vector<1x1xf32>
    %143 = vector.broadcast %142 : vector<1x1xf32> to vector<1x8xf32>
    %144 = arith.addf %141, %143 : vector<1x8xf32>
    %145 = vector.shape_cast %144 : vector<1x8xf32> to vector<1x1x8xf32>
    %c0_70 = arith.constant 0 : index
    %c0_71 = arith.constant 0 : index
    %c0_72 = arith.constant 0 : index
    %146 = vector.load %arg17[%c0_70, %c0_71, %c0_72] : memref<1x1x8xf32, #tpu.memory_space<vmem>>, vector<1x1x8xf32>
    tpu.vector_store %arg17[%c0_70, %c0_71, %c0_72], %145 {strides = array<i32>} : memref<1x1x8xf32, #tpu.memory_space<vmem>>, vector<1x1x8xf32>,
    return
  }
  func.func @transform_0(%arg0: i32) -> (i32, i32) {
    %c0_i32 = arith.constant 0 : i32
    %c0_i32_0 = arith.constant 0 : i32
    return %arg0, %c0_i32 : i32, i32
  }
  func.func @transform_1(%arg0: i32) -> (i32, i32) {
    %c0_i32 = arith.constant 0 : i32
    %c0_i32_0 = arith.constant 0 : i32
    %c0_i32_1 = arith.constant 0 : i32
    return %c0_i32, %c0_i32_0 : i32, i32
  }
  func.func @transform_2(%arg0: i32) -> (i32, i32) {
    %c0_i32 = arith.constant 0 : i32
    %c0_i32_0 = arith.constant 0 : i32
    %c0_i32_1 = arith.constant 0 : i32
    return %c0_i32, %c0_i32_0 : i32, i32
  }
  func.func @transform_3(%arg0: i32) -> (i32, i32) {
    %c0_i32 = arith.constant 0 : i32
    %c0_i32_0 = arith.constant 0 : i32
    %c0_i32_1 = arith.constant 0 : i32
    return %c0_i32, %c0_i32_0 : i32, i32
  }
  func.func @transform_4(%arg0: i32) -> (i32, i32) {
    %c0_i32 = arith.constant 0 : i32
    %c0_i32_0 = arith.constant 0 : i32
    %c0_i32_1 = arith.constant 0 : i32
    return %c0_i32, %c0_i32_0 : i32, i32
  }
  func.func @transform_5(%arg0: i32) -> (i32, i32) {
    %c0_i32 = arith.constant 0 : i32
    %c0_i32_0 = arith.constant 0 : i32
    %c0_i32_1 = arith.constant 0 : i32
    return %c0_i32, %c0_i32_0 : i32, i32
  }
  func.func @transform_6(%arg0: i32) -> (i32, i32) {
    %c0_i32 = arith.constant 0 : i32
    %c0_i32_0 = arith.constant 0 : i32
    %c0_i32_1 = arith.constant 0 : i32
    return %c0_i32, %c0_i32_0 : i32, i32
  }
  func.func @transform_7(%arg0: i32) -> (i32, i32) {
    %c0_i32 = arith.constant 0 : i32
    %c0_i32_0 = arith.constant 0 : i32
    %c0_i32_1 = arith.constant 0 : i32
    return %c0_i32, %c0_i32_0 : i32, i32
  }
  func.func @transform_8(%arg0: i32) -> (i32, i32) {
    %c0_i32 = arith.constant 0 : i32
    %c0_i32_0 = arith.constant 0 : i32
    %c0_i32_1 = arith.constant 0 : i32
    return %c0_i32, %c0_i32_0 : i32, i32
  }
  func.func @transform_9(%arg0: i32) -> (i32, i32) {
    %c0_i32 = arith.constant 0 : i32
    %c0_i32_0 = arith.constant 0 : i32
    %c0_i32_1 = arith.constant 0 : i32
    return %c0_i32, %c0_i32_0 : i32, i32
  }
  func.func @transform_10(%arg0: i32) -> (i32, i32, i32) {
    %c0_i32 = arith.constant 0 : i32
    %c0_i32_0 = arith.constant 0 : i32
    %c0_i32_1 = arith.constant 0 : i32
    %c0_i32_2 = arith.constant 0 : i32
    return %c0_i32, %c0_i32_0, %c0_i32_1 : i32, i32, i32
  }
  func.func @transform_11(%arg0: i32) -> (i32, i32, i32) {
    %c0_i32 = arith.constant 0 : i32
    %c0_i32_0 = arith.constant 0 : i32
    %c0_i32_1 = arith.constant 0 : i32
    %c0_i32_2 = arith.constant 0 : i32
    return %c0_i32, %c0_i32_0, %c0_i32_1 : i32, i32, i32
  }
  func.func @transform_12(%arg0: i32) -> (i32, i32, i32) {
    %c0_i32 = arith.constant 0 : i32
    %c0_i32_0 = arith.constant 0 : i32
    %c0_i32_1 = arith.constant 0 : i32
    %c0_i32_2 = arith.constant 0 : i32
    return %c0_i32, %c0_i32_0, %c0_i32_1 : i32, i32, i32
  }
  func.func @transform_13(%arg0: i32) -> (i32, i32, i32) {
    %c0_i32 = arith.constant 0 : i32
    %c0_i32_0 = arith.constant 0 : i32
    %c0_i32_1 = arith.constant 0 : i32
    %c0_i32_2 = arith.constant 0 : i32
    return %c0_i32, %c0_i32_0, %c0_i32_1 : i32, i32, i32
  }
  func.func @transform_14(%arg0: i32) -> (i32, i32) {
    %c0_i32 = arith.constant 0 : i32
    %c0_i32_0 = arith.constant 0 : i32
    %c0_i32_1 = arith.constant 0 : i32
    return %c0_i32, %c0_i32_0 : i32, i32
  }
  func.func @transform_15(%arg0: i32) -> (i32, i32) {
    %c0_i32 = arith.constant 0 : i32
    %c0_i32_0 = arith.constant 0 : i32
    %c0_i32_1 = arith.constant 0 : i32
    return %c0_i32, %c0_i32_0 : i32, i32
  }
  func.func @transform_16(%arg0: i32) -> (i32, i32, i32) {
    %c0_i32 = arith.constant 0 : i32
    %c0_i32_0 = arith.constant 0 : i32
    %c0_i32_1 = arith.constant 0 : i32
    return %arg0, %c0_i32, %c0_i32_0 : i32, i32, i32
  }
}

</mosaic_0001>

<llo_original>
// kernel: tpu_custom_call.1
$region0: #{tpu_custom_call.1}
  #allocation0 [shape = 'u32[]', space=smem, size = 0x4, offset = 0x4, fixed_abs, tag = 'smem constant byte address 0x4 - core index']
  #allocation1 [shape = 'u32[72,128]{1,0:T(1,128)}', space=vmem, size = 0x9000, scoped, tag = 'internal scratch']
  #allocation2 [shape = 'f32[1,1]{1,0:T(1,128)S(1)}', space=vmem, size = 0x200, scoped, tag = 'scoped memory for tpu_custom_call.1']
  %s0 = inlined_call_operand.hbm [shape: f32[8,20], index: 0, kind: input, shape index: {}]
  %s1 = inlined_call_operand.hbm [shape: f32[20,32], index: 1, kind: input, shape index: {}]
  %s2 = inlined_call_operand.hbm [shape: f32[1,32], index: 2, kind: input, shape index: {}]
  %s3 = inlined_call_operand.hbm [shape: f32[1,32], index: 3, kind: input, shape index: {}]
  %s4 = inlined_call_operand.hbm [shape: f32[1,32], index: 4, kind: input, shape index: {}]
  %s5 = inlined_call_operand.hbm [shape: f32[32,32], index: 5, kind: input, shape index: {}]
  %s6 = inlined_call_operand.hbm [shape: f32[20,32], index: 6, kind: input, shape index: {}]
  %s7 = inlined_call_operand.vmem [shape: f32[1,32], index: 7, kind: input, shape index: {}]
  %s8 = inlined_call_operand.vmem [shape: f32[1,32], index: 8, kind: input, shape index: {}]
  %s9 = inlined_call_operand.vmem [shape: f32[1,32], index: 9, kind: input, shape index: {}]
  %s10 = inlined_call_operand.hbm [shape: f32[2,32,32], index: 10, kind: input, shape index: {}]
  %s11 = inlined_call_operand.vmem [shape: f32[2,1,32], index: 11, kind: input, shape index: {}]
  %s12 = inlined_call_operand.vmem [shape: f32[2,1,32], index: 12, kind: input, shape index: {}]
  %s13 = inlined_call_operand.vmem [shape: f32[2,1,32], index: 13, kind: input, shape index: {}]
  %s14 = inlined_call_operand.vmem [shape: f32[1,32], index: 14, kind: input, shape index: {}]
  %s15 = inlined_call_operand.<no memory space> [shape: f32[1,1], index: 15, kind: input, shape index: {}]
  %s16 = inlined_call_operand.hbm [shape: f32[1,1,8], index: 16, kind: output, shape index: {}]
  %s17 = sld [smem:[#allocation0]]
  $region106: #{tpu_custom_call.1} parent=0
    _
  %s19 = ssub.s32 1, %s17
  %s20 = scalar_select 0, %s19, %s17
  %v21 = vstv %s15
  %22 = vst [vmem:[#allocation2] sm:$0x1] %v21
  $region1: #{tpu_custom_call.1} parent=0
    #allocation3 [shape = 'u8[4096]{0}', space=vmem, size = 0x1000, scoped, tag = 'input window, operand 0, single buffered']
    #allocation4 [shape = 's32[1]{0}', space=sflag, size = 0x4, scoped, tag = 'scoped memory for tpu_custom_call.1']
    #allocation5 [shape = 's32[1]{0}', space=sflag, size = 0x4, scoped, tag = 'scoped memory for tpu_custom_call.1']
    #allocation6 [shape = 'u8[12288]{0}', space=vmem, size = 0x3000, scoped, tag = 'input window, operand 1, single buffered']
    #allocation7 [shape = 's32[1]{0}', space=sflag, size = 0x4, scoped, tag = 'scoped memory for tpu_custom_call.1']
    #allocation8 [shape = 'u8[512]{0}', space=vmem, size = 0x400, scoped, tag = 'input window, operand 2, single buffered']
    #allocation9 [shape = 'u8[512]{0}', space=vmem, size = 0x400, scoped, tag = 'input window, operand 3, single buffered']
    #allocation10 [shape = 's32[1]{0}', space=sflag, size = 0x4, scoped, tag = 'scoped memory for tpu_custom_call.1']
    #allocation11 [shape = 'u8[512]{0}', space=vmem, size = 0x400, scoped, tag = 'input window, operand 4, single buffered']
    #allocation12 [shape = 'u8[16384]{0}', space=vmem, size = 0x4000, scoped, tag = 'input window, operand 5, single buffered']
    #allocation13 [shape = 's32[1]{0}', space=sflag, size = 0x4, scoped, tag = 'scoped memory for tpu_custom_call.1']
    #allocation14 [shape = 'u8[12288]{0}', space=vmem, size = 0x3000, scoped, tag = 'input window, operand 6, single buffered']
    #allocation15 [shape = 'u8[32768]{0}', space=vmem, size = 0x8000, scoped, tag = 'input window, operand 10, single buffered']
    #allocation16 [shape = 's32[1]{0}', space=sflag, size = 0x4, scoped, tag = 'scoped memory for tpu_custom_call.1']
    #allocation17 [shape = 'u8[512]{0}', space=vmem, size = 0x400, scoped, tag = 'output window, operand 0, single buffered']
    %23 = vsyncpa [#allocation4], 0
    %24 = vsyncpa [#allocation7], 0
    %25 = vsyncpa [#allocation10], 0
    %26 = vsyncpa [#allocation13], 0
    %27 = vsyncpa [#allocation16], 0
    %28 = vsyncpa [#allocation5], 0
    // Predicated region
    $region2: #{tpu_custom_call.1} parent=1 // pred_check
      _
    $region3: #{tpu_custom_call.1} parent=1 // pred_check_branch
      %30 = sbr.rel (0) target = $region5
    $region4: #{tpu_custom_call.1} parent=1 // pred_region
      %32 = vsyncadd [#allocation4], 0
      %s34 = sshll.u32 %s0, 4
      %s35 = int_to_ptr.hbm [resolvable:$true] %s34
      %s36 = sshll.u32 [#allocation3], 4
      %s37 = int_to_ptr.vmem [resolvable:$true] %s36
      %39 = dma.hbm_to_vmem [thread:$0]  %s35, 128, %s37, [#allocation4]
    $region5: #{tpu_custom_call.1} parent=1 // pred_fallthru
      _
    // Predicated region
    $region6: #{tpu_custom_call.1} parent=1 // pred_check
      _
    $region7: #{tpu_custom_call.1} parent=1 // pred_check_branch
      %41 = sbr.rel (0) target = $region9
    $region8: #{tpu_custom_call.1} parent=1 // pred_region
      %43 = vsyncadd [#allocation7], 0
      %s44 = sshll.u32 %s1, 4
      %s45 = int_to_ptr.hbm [resolvable:$true] %s44
      %s46 = sshll.u32 [#allocation6], 4
      %s47 = int_to_ptr.vmem [resolvable:$true] %s46
      %52 = dma.hbm_to_vmem [thread:$0]  %s45, 384, %s47, [#allocation7], 128, 128, 8
    $region9: #{tpu_custom_call.1} parent=1 // pred_fallthru
      _
    // Predicated region
    $region10: #{tpu_custom_call.1} parent=1 // pred_check
      _
    $region11: #{tpu_custom_call.1} parent=1 // pred_check_branch
      %54 = sbr.rel (0) target = $region13
    $region12: #{tpu_custom_call.1} parent=1 // pred_region
      %56 = vsyncadd [#allocation7], 0
      %s58 = sshll.u32 %s2, 4
      %s59 = int_to_ptr.hbm [resolvable:$true] %s58
      %s60 = sshll.u32 [#allocation8], 4
      %s61 = int_to_ptr.vmem [resolvable:$true] %s60
      %63 = dma.hbm_to_vmem [thread:$0]  %s59, 16, %s61, [#allocation7]
    $region13: #{tpu_custom_call.1} parent=1 // pred_fallthru
      _
    // Predicated region
    $region14: #{tpu_custom_call.1} parent=1 // pred_check
      _
    $region15: #{tpu_custom_call.1} parent=1 // pred_check_branch
      %65 = sbr.rel (0) target = $region17
    $region16: #{tpu_custom_call.1} parent=1 // pred_region
      %67 = vsyncadd [#allocation10], 0
      %s69 = sshll.u32 %s3, 4
      %s70 = int_to_ptr.hbm [resolvable:$true] %s69
      %s71 = sshll.u32 [#allocation9], 4
      %s72 = int_to_ptr.vmem [resolvable:$true] %s71
      %74 = dma.hbm_to_vmem [thread:$0]  %s70, 16, %s72, [#allocation10]
    $region17: #{tpu_custom_call.1} parent=1 // pred_fallthru
      _
    // Predicated region
    $region18: #{tpu_custom_call.1} parent=1 // pred_check
      _
    $region19: #{tpu_custom_call.1} parent=1 // pred_check_branch
      %76 = sbr.rel (0) target = $region21
    $region20: #{tpu_custom_call.1} parent=1 // pred_region
      %78 = vsyncadd [#allocation10], 0
      %s80 = sshll.u32 %s4, 4
      %s81 = int_to_ptr.hbm [resolvable:$true] %s80
      %s82 = sshll.u32 [#allocation11], 4
      %s83 = int_to_ptr.vmem [resolvable:$true] %s82
      %85 = dma.hbm_to_vmem [thread:$0]  %s81, 16, %s83, [#allocation10]
    $region21: #{tpu_custom_call.1} parent=1 // pred_fallthru
      _
    // Predicated region
    $region22: #{tpu_custom_call.1} parent=1 // pred_check
      _
    $region23: #{tpu_custom_call.1} parent=1 // pred_check_branch
      %87 = sbr.rel (0) target = $region25
    $region24: #{tpu_custom_call.1} parent=1 // pred_region
      %89 = vsyncadd [#allocation13], 0
      %s90 = sshll.u32 %s5, 4
      %s91 = int_to_ptr.hbm [resolvable:$true] %s90
      %s92 = sshll.u32 [#allocation12], 4
      %s93 = int_to_ptr.vmem [resolvable:$true] %s92
      %98 = dma.hbm_to_vmem [thread:$0]  %s91, 512, %s93, [#allocation13], 128, 128, 8
    $region25: #{tpu_custom_call.1} parent=1 // pred_fallthru
      _
    // Predicated region
    $region26: #{tpu_custom_call.1} parent=1 // pred_check
      _
    $region27: #{tpu_custom_call.1} parent=1 // pred_check_branch
      %100 = sbr.rel (0) target = $region29
    $region28: #{tpu_custom_call.1} parent=1 // pred_region
      %102 = vsyncadd [#allocation13], 0
      %s103 = sshll.u32 %s6, 4
      %s104 = int_to_ptr.hbm [resolvable:$true] %s103
      %s105 = sshll.u32 [#allocation14], 4
      %s106 = int_to_ptr.vmem [resolvable:$true] %s105
      %111 = dma.hbm_to_vmem [thread:$0]  %s104, 384, %s106, [#allocation13], 128, 128, 8
    $region29: #{tpu_custom_call.1} parent=1 // pred_fallthru
      _
    // Predicated region
    $region30: #{tpu_custom_call.1} parent=1 // pred_check
      _
    $region31: #{tpu_custom_call.1} parent=1 // pred_check_branch
      %113 = sbr.rel (0) target = $region33
    $region32: #{tpu_custom_call.1} parent=1 // pred_region
      _
    $region33: #{tpu_custom_call.1} parent=1 // pred_fallthru
      _
    // Predicated region
    $region34: #{tpu_custom_call.1} parent=1 // pred_check
      _
    $region35: #{tpu_custom_call.1} parent=1 // pred_check_branch
      %115 = sbr.rel (0) target = $region37
    $region36: #{tpu_custom_call.1} parent=1 // pred_region
      _
    $region37: #{tpu_custom_call.1} parent=1 // pred_fallthru
      _
    // Predicated region
    $region38: #{tpu_custom_call.1} parent=1 // pred_check
      _
    $region39: #{tpu_custom_call.1} parent=1 // pred_check_branch
      %117 = sbr.rel (0) target = $region41
    $region40: #{tpu_custom_call.1} parent=1 // pred_region
      _
    $region41: #{tpu_custom_call.1} parent=1 // pred_fallthru
      _
    // Predicated region
    $region42: #{tpu_custom_call.1} parent=1 // pred_check
      _
    $region43: #{tpu_custom_call.1} parent=1 // pred_check_branch
      %119 = sbr.rel (0) target = $region45
    $region44: #{tpu_custom_call.1} parent=1 // pred_region
      %121 = vsyncadd [#allocation16], 0
      %s122 = sshll.u32 %s10, 4
      %s123 = int_to_ptr.hbm [resolvable:$true] %s122
      %s124 = sshll.u32 [#allocation15], 4
      %s125 = int_to_ptr.vmem [resolvable:$true] %s124
      %130 = dma.hbm_to_vmem [thread:$0]  %s123, 1024, %s125, [#allocation16], 128, 128, 8
    $region45: #{tpu_custom_call.1} parent=1 // pred_fallthru
      _
    // Predicated region
    $region46: #{tpu_custom_call.1} parent=1 // pred_check
      _
    $region47: #{tpu_custom_call.1} parent=1 // pred_check_branch
      %132 = sbr.rel (0) target = $region49
    $region48: #{tpu_custom_call.1} parent=1 // pred_region
      _
    $region49: #{tpu_custom_call.1} parent=1 // pred_fallthru
      _
    // Predicated region
    $region50: #{tpu_custom_call.1} parent=1 // pred_check
      _
    $region51: #{tpu_custom_call.1} parent=1 // pred_check_branch
      %134 = sbr.rel (0) target = $region53
    $region52: #{tpu_custom_call.1} parent=1 // pred_region
      _
    $region53: #{tpu_custom_call.1} parent=1 // pred_fallthru
      _
    // Predicated region
    $region54: #{tpu_custom_call.1} parent=1 // pred_check
      _
    $region55: #{tpu_custom_call.1} parent=1 // pred_check_branch
      %136 = sbr.rel (0) target = $region57
    $region56: #{tpu_custom_call.1} parent=1 // pred_region
      _
    $region57: #{tpu_custom_call.1} parent=1 // pred_fallthru
      _
    // Predicated region
    $region58: #{tpu_custom_call.1} parent=1 // pred_check
      _
    $region59: #{tpu_custom_call.1} parent=1 // pred_check_branch
      %138 = sbr.rel (0) target = $region61
    $region60: #{tpu_custom_call.1} parent=1 // pred_region
      _
    $region61: #{tpu_custom_call.1} parent=1 // pred_fallthru
      _
    // Predicated region
    $region62: #{tpu_custom_call.1} parent=1 // pred_check
      _
    $region63: #{tpu_custom_call.1} parent=1 // pred_check_branch
      %140 = sbr.rel (0) target = $region65
    $region64: #{tpu_custom_call.1} parent=1 // pred_region
      _
    $region65: #{tpu_custom_call.1} parent=1 // pred_fallthru
      _
    // Predicated region
    $region66: #{tpu_custom_call.1} parent=1 // pred_check
      _
    $region67: #{tpu_custom_call.1} parent=1 // pred_check_branch
      %142 = sbr.rel (0) target = $region69
    $region68: #{tpu_custom_call.1} parent=1 // pred_region
      %144 = dma.done [#allocation4], 128
    $region69: #{tpu_custom_call.1} parent=1 // pred_fallthru
      _
    // Predicated region
    $region70: #{tpu_custom_call.1} parent=1 // pred_check
      _
    $region71: #{tpu_custom_call.1} parent=1 // pred_check_branch
      %146 = sbr.rel (0) target = $region73
    $region72: #{tpu_custom_call.1} parent=1 // pred_region
      %148 = dma.done [#allocation7], 384
    $region73: #{tpu_custom_call.1} parent=1 // pred_fallthru
      _
    // Predicated region
    $region74: #{tpu_custom_call.1} parent=1 // pred_check
      _
    $region75: #{tpu_custom_call.1} parent=1 // pred_check_branch
      %150 = sbr.rel (0) target = $region77
    $region76: #{tpu_custom_call.1} parent=1 // pred_region
      %152 = dma.done [#allocation7], 16
    $region77: #{tpu_custom_call.1} parent=1 // pred_fallthru
      _
    // Predicated region
    $region78: #{tpu_custom_call.1} parent=1 // pred_check
      _
    $region79: #{tpu_custom_call.1} parent=1 // pred_check_branch
      %154 = sbr.rel (0) target = $region81
    $region80: #{tpu_custom_call.1} parent=1 // pred_region
      %156 = dma.done [#allocation10], 16
    $region81: #{tpu_custom_call.1} parent=1 // pred_fallthru
      _
    // Predicated region
    $region82: #{tpu_custom_call.1} parent=1 // pred_check
      _
    $region83: #{tpu_custom_call.1} parent=1 // pred_check_branch
      %158 = sbr.rel (0) target = $region85
    $region84: #{tpu_custom_call.1} parent=1 // pred_region
      %160 = dma.done [#allocation10], 16
    $region85: #{tpu_custom_call.1} parent=1 // pred_fallthru
      _
    // Predicated region
    $region86: #{tpu_custom_call.1} parent=1 // pred_check
      _
    $region87: #{tpu_custom_call.1} parent=1 // pred_check_branch
      %162 = sbr.rel (0) target = $region89
    $region88: #{tpu_custom_call.1} parent=1 // pred_region
      %164 = dma.done [#allocation13], 512
    $region89: #{tpu_custom_call.1} parent=1 // pred_fallthru
      _
    // Predicated region
    $region90: #{tpu_custom_call.1} parent=1 // pred_check
      _
    $region91: #{tpu_custom_call.1} parent=1 // pred_check_branch
      %166 = sbr.rel (0) target = $region93
    $region92: #{tpu_custom_call.1} parent=1 // pred_region
      %168 = dma.done [#allocation13], 384
    $region93: #{tpu_custom_call.1} parent=1 // pred_fallthru
      _
    // Predicated region
    $region94: #{tpu_custom_call.1} parent=1 // pred_check
      _
    $region95: #{tpu_custom_call.1} parent=1 // pred_check_branch
      %170 = sbr.rel (0) target = $region97
    $region96: #{tpu_custom_call.1} parent=1 // pred_region
      %172 = dma.done [#allocation16], 1024
    $region97: #{tpu_custom_call.1} parent=1 // pred_fallthru
      _
    %v173 = vld [vmem:[#allocation3] sm:$0xff]
    %v174 = vld [vmem:[#allocation8] sm:$0x1]
    %v175 = vld [vmem:[#allocation9] sm:$0x1]
    %v176 = vld [vmem:[#allocation11] sm:$0x1]
    %v177 = vld [vmem:[%s7] sm:$0x1]
    %v178 = vld [vmem:[%s8] sm:$0x1]
    %v179 = vld [vmem:[%s9] sm:$0x1]
    %v180 = vld [vmem:[#allocation6] sm:$0xff]
    %v181 = vld [vmem:[#allocation6 + $0x8] sm:$0xff]
    %v182 = vld [vmem:[#allocation6 + $0x10] sm:$0xf]
    %v184 = vperm.slane %v174, 0
    %vm186 = vcmask 162816
    %v188 = vsel %vm186, %v173, 0
    %vm190 = vcmask 1043456
    %v192 = vsel %vm190, %v182, 0
    %194 = vmatpush.msra.mxu0 0.0
    %195 = vmatpush.msra.mxu0 0.0
    %196 = vmatpush.msra.mxu0 0.0
    %197 = vmatpush.msra.mxu0 0.0
    %198 = vmatpush.msra.mxu0 0.0
    %199 = vmatpush.msra.mxu0 0.0
    %200 = vmatpush.msra.mxu0 0.0
    %201 = vmatpush.msra.mxu0 0.0
    %202 = vmatpush.msra.mxu0 0.0
    %203 = vmatpush.msra.mxu0 0.0
    %204 = vmatpush.msra.mxu0 0.0
    %205 = vmatpush.msra.mxu0 0.0
    %206 = vmatpush.msra.mxu0 0.0
    %207 = vmatpush.msra.mxu0 %v192
    %208 = vmatpush.msra.mxu0 %v181
    %209 = vmatpush.msra.mxu0 %v180
    %210 = vmatmul.f32.gmra.mxu0 %v188
    %v211 = vpop.f32.mrf.mxu0
    %v212 = vadd.f32 %v184, %v211
    %213 = vdwg.mxu0
    %vm214 = vcmask 261120
    %v215 = vsel %vm214, %v212, 0.0
    %216 = vadd.xlane.f32.xlu0 %v215
    %v217 = vpop.xlane.xlu0 %216
    %v218 = vrcp.pop 32.0
    %v219 = vmul.f32 32.0, %v218
    %v220 = vsub.f32 1.0, %v219
    %v221 = vmul.f32 %v218, %v220
    %v222 = vadd.f32 %v218, %v221
    %vm223 = vweird.f32 %v218
    %v224 = vsel %vm223, %v218, %v222
    %v225 = vmul.f32 %v217, %v224
    %v226 = vsub.f32 %v212, %v225
    %v227 = vmul.f32 %v226, %v226
    %v228 = vsel %vm214, %v227, 0.0
    %229 = vadd.xlane.f32.xlu0 %v228
    %v230 = vpop.xlane.xlu0 %229
    %v231 = vmul.f32 %v230, %v224
    %v232 = vadd.f32 %v231, 32.0
    %v233 = vrsqrt.pop %v232
    %v234 = vmul.f32 %v233, %v232
    %v235 = vmul.f32 %v234, %v233
    %v236 = vmul.f32 0.5, %v235
    %v237 = vsub.f32 1.5, %v236
    %v238 = vmul.f32 %v233, %v237
    %vm239 = vweird.f32 %v232
    %vm240 = vweird.f32 %v233
    %vm241 = vmor %vm239, %vm240
    %v242 = vsel %vm241, %v233, %v238
    %v243 = vmul.f32 %v226, %v242
    %v245 = vperm.slane %v175, 0
    %v247 = vmul.f32 %v243, %v245
    %v249 = vperm.slane %v176, 0
    %v251 = vadd.f32 %v247, %v249
    %v252 = vmax.f32 %v251, 0.0
    %v253 = vld [vmem:[#allocation12] sm:$0xff]
    %v254 = vld [vmem:[#allocation12 + $0x8] sm:$0xff]
    %v255 = vld [vmem:[#allocation12 + $0x10] sm:$0xff]
    %v256 = vld [vmem:[#allocation12 + $0x18] sm:$0xff]
    %v257 = vld [vmem:[#allocation14] sm:$0xff]
    %v258 = vld [vmem:[#allocation14 + $0x8] sm:$0xff]
    %v259 = vld [vmem:[#allocation14 + $0x10] sm:$0xf]
    %v261 = vsel %vm190, %v259, 0
    %263 = vmatpush.msra.mxu0 0.0
    %264 = vmatpush.msra.mxu0 0.0
    %265 = vmatpush.msra.mxu0 0.0
    %266 = vmatpush.msra.mxu0 0.0
    %267 = vmatpush.msra.mxu0 0.0
    %268 = vmatpush.msra.mxu0 0.0
    %269 = vmatpush.msra.mxu0 0.0
    %270 = vmatpush.msra.mxu0 0.0
    %271 = vmatpush.msra.mxu0 0.0
    %272 = vmatpush.msra.mxu0 0.0
    %273 = vmatpush.msra.mxu0 0.0
    %274 = vmatpush.msra.mxu0 0.0
    %275 = vmatpush.msra.mxu0 0.0
    %276 = vmatpush.msra.mxu0 %v261
    %277 = vmatpush.msra.mxu0 %v258
    %278 = vmatpush.msra.mxu0 %v257
    %279 = vmatmul.f32.gmra.mxu0 %v188
    %v280 = vpop.f32.mrf.mxu0
    %v281 = vadd.f32 0.0, %v280
    %282 = vdwg.mxu0
    %v284 = vsel %vm214, %v252, 0
    %286 = vmatpush.msra.mxu0 0.0
    %287 = vmatpush.msra.mxu0 0.0
    %288 = vmatpush.msra.mxu0 0.0
    %289 = vmatpush.msra.mxu0 0.0
    %290 = vmatpush.msra.mxu0 0.0
    %291 = vmatpush.msra.mxu0 0.0
    %292 = vmatpush.msra.mxu0 0.0
    %293 = vmatpush.msra.mxu0 0.0
    %294 = vmatpush.msra.mxu0 0.0
    %295 = vmatpush.msra.mxu0 0.0
    %296 = vmatpush.msra.mxu0 0.0
    %297 = vmatpush.msra.mxu0 0.0
    %298 = vmatpush.msra.mxu0 %v256
    %299 = vmatpush.msra.mxu0 %v255
    %300 = vmatpush.msra.mxu0 %v254
    %301 = vmatpush.msra.mxu0 %v253
    %302 = vmatmul.f32.gmra.mxu0 %v284
    %v303 = vpop.f32.mrf.mxu0
    %v304 = vadd.f32 %v281, %v303
    %305 = vdwg.mxu0
    %v307 = vperm.slane %v177, 0
    %v309 = vadd.f32 %v304, %v307
    %v310 = vsel %vm214, %v309, 0.0
    %311 = vadd.xlane.f32.xlu0 %v310
    %v312 = vpop.xlane.xlu0 %311
    %v313 = vmul.f32 %v312, %v224
    %v314 = vsub.f32 %v309, %v313
    %v315 = vmul.f32 %v314, %v314
    %v316 = vsel %vm214, %v315, 0.0
    %317 = vadd.xlane.f32.xlu0 %v316
    %v318 = vpop.xlane.xlu0 %317
    %v319 = vmul.f32 %v318, %v224
    %v320 = vadd.f32 %v319, 32.0
    %v321 = vrsqrt.pop %v320
    %v322 = vmul.f32 %v321, %v320
    %v323 = vmul.f32 %v322, %v321
    %v324 = vmul.f32 0.5, %v323
    %v325 = vsub.f32 1.5, %v324
    %v326 = vmul.f32 %v321, %v325
    %vm327 = vweird.f32 %v320
    %vm328 = vweird.f32 %v321
    %vm329 = vmor %vm327, %vm328
    %v330 = vsel %vm329, %v321, %v326
    %v331 = vmul.f32 %v314, %v330
    %v333 = vperm.slane %v178, 0
    %v335 = vmul.f32 %v331, %v333
    %v337 = vperm.slane %v179, 0
    %v339 = vadd.f32 %v335, %v337
    %v340 = vmax.f32 %v339, 0.0
    %v341 = vld [vmem:[#allocation15] sm:$0xff]
    %v342 = vld [vmem:[#allocation15 + $0x8] sm:$0xff]
    %v343 = vld [vmem:[#allocation15 + $0x10] sm:$0xff]
    %v344 = vld [vmem:[#allocation15 + $0x18] sm:$0xff]
    %v345 = vld [vmem:[%s11] sm:$0x1]
    %v347 = vperm.slane %v345, 0
    %v350 = vsel %vm214, %v340, 0
    %352 = vmatpush.msra.mxu0 0.0
    %353 = vmatpush.msra.mxu0 0.0
    %354 = vmatpush.msra.mxu0 0.0
    %355 = vmatpush.msra.mxu0 0.0
    %356 = vmatpush.msra.mxu0 0.0
    %357 = vmatpush.msra.mxu0 0.0
    %358 = vmatpush.msra.mxu0 0.0
    %359 = vmatpush.msra.mxu0 0.0
    %360 = vmatpush.msra.mxu0 0.0
    %361 = vmatpush.msra.mxu0 0.0
    %362 = vmatpush.msra.mxu0 0.0
    %363 = vmatpush.msra.mxu0 0.0
    %364 = vmatpush.msra.mxu0 %v344
    %365 = vmatpush.msra.mxu0 %v343
    %366 = vmatpush.msra.mxu0 %v342
    %367 = vmatpush.msra.mxu0 %v341
    %368 = vmatmul.f32.gmra.mxu0 %v350
    %v369 = vpop.f32.mrf.mxu0
    %v370 = vadd.f32 %v347, %v369
    %371 = vdwg.mxu0
    %v372 = vmax.f32 %v370, 0.0
    %v373 = vld [vmem:[%s12] sm:$0x1]
    %v374 = vld [vmem:[%s13] sm:$0x1]
    %v375 = vsel %vm214, %v372, 0.0
    %376 = vadd.xlane.f32.xlu0 %v375
    %v377 = vpop.xlane.xlu0 %376
    %v378 = vmul.f32 %v377, %v224
    %v379 = vsub.f32 %v372, %v378
    %v380 = vmul.f32 %v379, %v379
    %v381 = vsel %vm214, %v380, 0.0
    %382 = vadd.xlane.f32.xlu0 %v381
    %v383 = vpop.xlane.xlu0 %382
    %v384 = vmul.f32 %v383, %v224
    %v385 = vadd.f32 %v384, 32.0
    %v386 = vrsqrt.pop %v385
    %v387 = vmul.f32 %v386, %v385
    %v388 = vmul.f32 %v387, %v386
    %v389 = vmul.f32 0.5, %v388
    %v390 = vsub.f32 1.5, %v389
    %v391 = vmul.f32 %v386, %v390
    %vm392 = vweird.f32 %v385
    %vm393 = vweird.f32 %v386
    %vm394 = vmor %vm392, %vm393
    %v395 = vsel %vm394, %v386, %v391
    %v396 = vmul.f32 %v379, %v395
    %v398 = vperm.slane %v373, 0
    %v400 = vmul.f32 %v396, %v398
    %v402 = vperm.slane %v374, 0
    %v404 = vadd.f32 %v400, %v402
    %v405 = vmax.f32 %v404, 0.0
    %s406 = scalar_lea.vmem [#allocation15], 32
    %v407 = vld [vmem:[%s406] sm:$0xff]
    %v408 = vld [vmem:[%s406 + $0x8] sm:$0xff]
    %v409 = vld [vmem:[%s406 + $0x10] sm:$0xff]
    %v410 = vld [vmem:[%s406 + $0x18] sm:$0xff]
    %s411 = scalar_lea.vmem %s11, 1
    %v412 = vld [vmem:[%s411] sm:$0x1]
    %v414 = vperm.slane %v412, 0
    %v417 = vsel %vm214, %v405, 0
    %419 = vmatpush.msra.mxu0 0.0
    %420 = vmatpush.msra.mxu0 0.0
    %421 = vmatpush.msra.mxu0 0.0
    %422 = vmatpush.msra.mxu0 0.0
    %423 = vmatpush.msra.mxu0 0.0
    %424 = vmatpush.msra.mxu0 0.0
    %425 = vmatpush.msra.mxu0 0.0
    %426 = vmatpush.msra.mxu0 0.0
    %427 = vmatpush.msra.mxu0 0.0
    %428 = vmatpush.msra.mxu0 0.0
    %429 = vmatpush.msra.mxu0 0.0
    %430 = vmatpush.msra.mxu0 0.0
    %431 = vmatpush.msra.mxu0 %v410
    %432 = vmatpush.msra.mxu0 %v409
    %433 = vmatpush.msra.mxu0 %v408
    %434 = vmatpush.msra.mxu0 %v407
    %435 = vmatmul.f32.gmra.mxu0 %v417
    %v436 = vpop.f32.mrf.mxu0
    %v437 = vadd.f32 %v414, %v436
    %438 = vdwg.mxu0
    %v439 = vmax.f32 %v437, 0.0
    %s440 = scalar_lea.vmem %s12, 1
    %v441 = vld [vmem:[%s440] sm:$0x1]
    %s442 = scalar_lea.vmem %s13, 1
    %v443 = vld [vmem:[%s442] sm:$0x1]
    %v444 = vsel %vm214, %v439, 0.0
    %445 = vadd.xlane.f32.xlu0 %v444
    %v446 = vpop.xlane.xlu0 %445
    %v447 = vmul.f32 %v446, %v224
    %v448 = vsub.f32 %v439, %v447
    %v449 = vmul.f32 %v448, %v448
    %v450 = vsel %vm214, %v449, 0.0
    %451 = vadd.xlane.f32.xlu0 %v450
    %v452 = vpop.xlane.xlu0 %451
    %v453 = vmul.f32 %v452, %v224
    %v454 = vadd.f32 %v453, 32.0
    %v455 = vrsqrt.pop %v454
    %v456 = vmul.f32 %v455, %v454
    %v457 = vmul.f32 %v456, %v455
    %v458 = vmul.f32 0.5, %v457
    %v459 = vsub.f32 1.5, %v458
    %v460 = vmul.f32 %v455, %v459
    %vm461 = vweird.f32 %v454
    %vm462 = vweird.f32 %v455
    %vm463 = vmor %vm461, %vm462
    %v464 = vsel %vm463, %v455, %v460
    %v465 = vmul.f32 %v448, %v464
    %v467 = vperm.slane %v441, 0
    %v469 = vmul.f32 %v465, %v467
    %v471 = vperm.slane %v443, 0
    %v473 = vadd.f32 %v469, %v471
    %v474 = vmax.f32 %v473, 0.0
    %v475 = vld [vmem:[%s14] sm:$0x1]
    %v476 = vld [vmem:[#allocation2] sm:$0x1]
    %478 = vset.pattern.permute.xlu0 0
    %479 = vperm.xlu0 %478, %v476
    %v480 = vpop.permute.xlu0 %479
    %v482 = vperm.slane %v480, 0
    %v484 = vsel %vm214, %v475, 0
    %v487 = vsel %vm214, %v474, 0
    %489 = vmatpush.xpose.msra.mxu0 0.0
    %490 = vmatpush.xpose.msra.mxu0 0.0
    %491 = vmatpush.xpose.msra.mxu0 0.0
    %492 = vmatpush.xpose.msra.mxu0 0.0
    %493 = vmatpush.xpose.msra.mxu0 0.0
    %494 = vmatpush.xpose.msra.mxu0 0.0
    %495 = vmatpush.xpose.msra.mxu0 0.0
    %496 = vmatpush.xpose.msra.mxu0 0.0
    %497 = vmatpush.xpose.msra.mxu0 0.0
    %498 = vmatpush.xpose.msra.mxu0 0.0
    %499 = vmatpush.xpose.msra.mxu0 0.0
    %500 = vmatpush.xpose.msra.mxu0 0.0
    %501 = vmatpush.xpose.msra.mxu0 0.0
    %502 = vmatpush.xpose.msra.mxu0 0.0
    %503 = vmatpush.xpose.msra.mxu0 0.0
    %504 = vmatpush.xpose.msra.mxu0 %v487
    %505 = vmatmul.f32.gmra.mxu0 %v484
    %v506 = vpop.f32.mrf.mxu0
    %v507 = vadd.f32 %v482, %v506
    %508 = vdwg.mxu0
    %vm509 = vcmask 57344
    %510 = vst.msk [vmem:[#allocation17] sm:$0x1] %vm509, %v507
    // Predicated region
    $region98: #{tpu_custom_call.1} parent=1 // pred_check
      _
    $region99: #{tpu_custom_call.1} parent=1 // pred_check_branch
      %512 = sbr.rel (0) target = $region101
    $region100: #{tpu_custom_call.1} parent=1 // pred_region
      %514 = vsyncadd [#allocation5], 0
      %s516 = sshll.u32 [#allocation17], 4
      %s517 = int_to_ptr.vmem [resolvable:$true] %s516
      %s518 = sshll.u32 %s16, 4
      %s519 = int_to_ptr.hbm [resolvable:$true] %s518
      %521 = dma.vmem_to_hbm [thread:$0]  %s517, 16, %s519, [#allocation5]
    $region101: #{tpu_custom_call.1} parent=1 // pred_fallthru
      _
    // Predicated region
    $region102: #{tpu_custom_call.1} parent=1 // pred_check
      _
    $region103: #{tpu_custom_call.1} parent=1 // pred_check_branch
      %523 = sbr.rel (0) target = $region105
    $region104: #{tpu_custom_call.1} parent=1 // pred_region
      %525 = dma.done [#allocation5], 16
    $region105: #{tpu_custom_call.1} parent=1 // pred_fallthru
      _
    %526 = vsyncpa [#allocation4], 1
    %527 = vsyncpa [#allocation7], 1
    %528 = vsyncpa [#allocation10], 1
    %529 = vsyncpa [#allocation13], 1
    %530 = vsyncpa [#allocation16], 1
    %531 = vsyncpa [#allocation5], 1

// kernel: tpu_custom_call.1
$region0: #{tpu_custom_call.1}
  #allocation0 [shape = 'u32[]', space=smem, size = 0x4, offset = 0x4, fixed_abs, tag = 'smem constant byte address 0x4 - core index']
  #allocation1 [shape = 'u32[72,128]{1,0:T(1,128)}', space=vmem, size = 0x9000, scoped, tag = 'internal scratch']
  #allocation2 [shape = 'f32[1,1]{1,0:T(1,128)S(1)}', space=vmem, size = 0x200, scoped, tag = 'scoped memory for tpu_custom_call.1']
  %s0 = inlined_call_operand.hbm [shape: f32[8,20], index: 0, kind: input, shape index: {}]
  %s1 = inlined_call_operand.hbm [shape: f32[20,32], index: 1, kind: input, shape index: {}]
  %s2 = inlined_call_operand.hbm [shape: f32[1,32], index: 2, kind: input, shape index: {}]
  %s3 = inlined_call_operand.hbm [shape: f32[1,32], index: 3, kind: input, shape index: {}]
  %s4 = inlined_call_operand.hbm [shape: f32[1,32], index: 4, kind: input, shape index: {}]
  %s5 = inlined_call_operand.hbm [shape: f32[32,32], index: 5, kind: input, shape index: {}]
  %s6 = inlined_call_operand.hbm [shape: f32[20,32], index: 6, kind: input, shape index: {}]
  %s7 = inlined_call_operand.vmem [shape: f32[1,32], index: 7, kind: input, shape index: {}]
  %s8 = inlined_call_operand.vmem [shape: f32[1,32], index: 8, kind: input, shape index: {}]
  %s9 = inlined_call_operand.vmem [shape: f32[1,32], index: 9, kind: input, shape index: {}]
  %s10 = inlined_call_operand.hbm [shape: f32[2,32,32], index: 10, kind: input, shape index: {}]
  %s11 = inlined_call_operand.vmem [shape: f32[2,1,32], index: 11, kind: input, shape index: {}]
  %s12 = inlined_call_operand.vmem [shape: f32[2,1,32], index: 12, kind: input, shape index: {}]
  %s13 = inlined_call_operand.vmem [shape: f32[2,1,32], index: 13, kind: input, shape index: {}]
  %s14 = inlined_call_operand.vmem [shape: f32[1,32], index: 14, kind: input, shape index: {}]
  %s15 = inlined_call_operand.<no memory space> [shape: f32[1,1], index: 15, kind: input, shape index: {}]
  %s16 = inlined_call_operand.hbm [shape: f32[1,1,8], index: 16, kind: output, shape index: {}]
  %s17 = sld [smem:[#allocation0]]
  $region106: #{tpu_custom_call.1} parent=0
    _
  %s19 = ssub.s32 1, %s17
  %s20 = scalar_select 0, %s19, %s17
  %v21 = vstv %s15
  %22 = vst [vmem:[#allocation2] sm:$0x1] %v21
  $region1: #{tpu_custom_call.1} parent=0
    #allocation3 [shape = 'u8[4096]{0}', space=vmem, size = 0x1000, scoped, tag = 'input window, operand 0, single buffered']
    #allocation4 [shape = 's32[1]{0}', space=sflag, size = 0x4, scoped, tag = 'scoped memory for tpu_custom_call.1']
    #allocation5 [shape = 's32[1]{0}', space=sflag, size = 0x4, scoped, tag = 'scoped memory for tpu_custom_call.1']
    #allocation6 [shape = 'u8[12288]{0}', space=vmem, size = 0x3000, scoped, tag = 'input window, operand 1, single buffered']
    #allocation7 [shape = 's32[1]{0}', space=sflag, size = 0x4, scoped, tag = 'scoped memory for tpu_custom_call.1']
    #allocation8 [shape = 'u8[512]{0}', space=vmem, size = 0x400, scoped, tag = 'input window, operand 2, single buffered']
    #allocation9 [shape = 'u8[512]{0}', space=vmem, size = 0x400, scoped, tag = 'input window, operand 3, single buffered']
    #allocation10 [shape = 's32[1]{0}', space=sflag, size = 0x4, scoped, tag = 'scoped memory for tpu_custom_call.1']
    #allocation11 [shape = 'u8[512]{0}', space=vmem, size = 0x400, scoped, tag = 'input window, operand 4, single buffered']
    #allocation12 [shape = 'u8[16384]{0}', space=vmem, size = 0x4000, scoped, tag = 'input window, operand 5, single buffered']
    #allocation13 [shape = 's32[1]{0}', space=sflag, size = 0x4, scoped, tag = 'scoped memory for tpu_custom_call.1']
    #allocation14 [shape = 'u8[12288]{0}', space=vmem, size = 0x3000, scoped, tag = 'input window, operand 6, single buffered']
    #allocation15 [shape = 'u8[32768]{0}', space=vmem, size = 0x8000, scoped, tag = 'input window, operand 10, single buffered']
    #allocation16 [shape = 's32[1]{0}', space=sflag, size = 0x4, scoped, tag = 'scoped memory for tpu_custom_call.1']
    #allocation17 [shape = 'u8[512]{0}', space=vmem, size = 0x400, scoped, tag = 'output window, operand 0, single buffered']
    %23 = vsyncpa [#allocation4], 0
    %24 = vsyncpa [#allocation7], 0
    %25 = vsyncpa [#allocation10], 0
    %26 = vsyncpa [#allocation13], 0
    %27 = vsyncpa [#allocation16], 0
    %28 = vsyncpa [#allocation5], 0
    // Predicated region
    $region2: #{tpu_custom_call.1} parent=1 // pred_check
      _
    $region3: #{tpu_custom_call.1} parent=1 // pred_check_branch
      %30 = sbr.rel (0) target = $region5
    $region4: #{tpu_custom_call.1} parent=1 // pred_region
      %32 = vsyncadd [#allocation4], 0
      %s34 = sshll.u32 %s0, 4
      %s35 = int_to_ptr.hbm [resolvable:$true] %s34
      %s36 = sshll.u32 [#allocation3], 4
      %s37 = int_to_ptr.vmem [resolvable:$true] %s36
      %39 = dma.hbm_to_vmem [thread:$0]  %s35, 128, %s37, [#allocation4]
    $region5: #{tpu_custom_call.1} parent=1 // pred_fallthru
      _
    // Predicated region
    $region6: #{tpu_custom_call.1} parent=1 // pred_check
      _
    $region7: #{tpu_custom_call.1} parent=1 // pred_check_branch
      %41 = sbr.rel (0) target = $region9
    $region8: #{tpu_custom_call.1} parent=1 // pred_region
      %43 = vsyncadd [#allocation7], 0
      %s44 = sshll.u32 %s1, 4
      %s45 = int_to_ptr.hbm [resolvable:$true] %s44
      %s46 = sshll.u32 [#allocation6], 4
      %s47 = int_to_ptr.vmem [resolvable:$true] %s46
      %52 = dma.hbm_to_vmem [thread:$0]  %s45, 384, %s47, [#allocation7], 128, 128, 8
    $region9: #{tpu_custom_call.1} parent=1 // pred_fallthru
      _
    // Predicated region
    $region10: #{tpu_custom_call.1} parent=1 // pred_check
      _
    $region11: #{tpu_custom_call.1} parent=1 // pred_check_branch
      %54 = sbr.rel (0) target = $region13
    $region12: #{tpu_custom_call.1} parent=1 // pred_region
      %56 = vsyncadd [#allocation7], 0
      %s58 = sshll.u32 %s2, 4
      %s59 = int_to_ptr.hbm [resolvable:$true] %s58
      %s60 = sshll.u32 [#allocation8], 4
      %s61 = int_to_ptr.vmem [resolvable:$true] %s60
      %63 = dma.hbm_to_vmem [thread:$0]  %s59, 16, %s61, [#allocation7]
    $region13: #{tpu_custom_call.1} parent=1 // pred_fallthru
      _
    // Predicated region
    $region14: #{tpu_custom_call.1} parent=1 // pred_check
      _
    $region15: #{tpu_custom_call.1} parent=1 // pred_check_branch
      %65 = sbr.rel (0) target = $region17
    $region16: #{tpu_custom_call.1} parent=1 // pred_region
      %67 = vsyncadd [#allocation10], 0
      %s69 = sshll.u32 %s3, 4
      %s70 = int_to_ptr.hbm [resolvable:$true] %s69
      %s71 = sshll.u32 [#allocation9], 4
      %s72 = int_to_ptr.vmem [resolvable:$true] %s71
      %74 = dma.hbm_to_vmem [thread:$0]  %s70, 16, %s72, [#allocation10]
    $region17: #{tpu_custom_call.1} parent=1 // pred_fallthru
      _
    // Predicated region
    $region18: #{tpu_custom_call.1} parent=1 // pred_check
      _
    $region19: #{tpu_custom_call.1} parent=1 // pred_check_branch
      %76 = sbr.rel (0) target = $region21
    $region20: #{tpu_custom_call.1} parent=1 // pred_region
      %78 = vsyncadd [#allocation10], 0
      %s80 = sshll.u32 %s4, 4
      %s81 = int_to_ptr.hbm [resolvable:$true] %s80
      %s82 = sshll.u32 [#allocation11], 4
      %s83 = int_to_ptr.vmem [resolvable:$true] %s82
      %85 = dma.hbm_to_vmem [thread:$0]  %s81, 16, %s83, [#allocation10]
    $region21: #{tpu_custom_call.1} parent=1 // pred_fallthru
      _
    // Predicated region
    $region22: #{tpu_custom_call.1} parent=1 // pred_check
      _
    $region23: #{tpu_custom_call.1} parent=1 // pred_check_branch
      %87 = sbr.rel (0) target = $region25
    $region24: #{tpu_custom_call.1} parent=1 // pred_region
      %89 = vsyncadd [#allocation13], 0
      %s90 = sshll.u32 %s5, 4
      %s91 = int_to_ptr.hbm [resolvable:$true] %s90
      %s92 = sshll.u32 [#allocation12], 4
      %s93 = int_to_ptr.vmem [resolvable:$true] %s92
      %98 = dma.hbm_to_vmem [thread:$0]  %s91, 512, %s93, [#allocation13], 128, 128, 8
    $region25: #{tpu_custom_call.1} parent=1 // pred_fallthru
      _
    // Predicated region
    $region26: #{tpu_custom_call.1} parent=1 // pred_check
      _
    $region27: #{tpu_custom_call.1} parent=1 // pred_check_branch
      %100 = sbr.rel (0) target = $region29
    $region28: #{tpu_custom_call.1} parent=1 // pred_region
      %102 = vsyncadd [#allocation13], 0
      %s103 = sshll.u32 %s6, 4
      %s104 = int_to_ptr.hbm [resolvable:$true] %s103
      %s105 = sshll.u32 [#allocation14], 4
      %s106 = int_to_ptr.vmem [resolvable:$true] %s105
      %111 = dma.hbm_to_vmem [thread:$0]  %s104, 384, %s106, [#allocation13], 128, 128, 8
    $region29: #{tpu_custom_call.1} parent=1 // pred_fallthru
      _
    // Predicated region
    $region30: #{tpu_custom_call.1} parent=1 // pred_check
      _
    $region31: #{tpu_custom_call.1} parent=1 // pred_check_branch
      %113 = sbr.rel (0) target = $region33
    $region32: #{tpu_custom_call.1} parent=1 // pred_region
      _
    $region33: #{tpu_custom_call.1} parent=1 // pred_fallthru
      _
    // Predicated region
    $region34: #{tpu_custom_call.1} parent=1 // pred_check
      _
    $region35: #{tpu_custom_call.1} parent=1 // pred_check_branch
      %115 = sbr.rel (0) target = $region37
    $region36: #{tpu_custom_call.1} parent=1 // pred_region
      _
    $region37: #{tpu_custom_call.1} parent=1 // pred_fallthru
      _
    // Predicated region
    $region38: #{tpu_custom_call.1} parent=1 // pred_check
      _
    $region39: #{tpu_custom_call.1} parent=1 // pred_check_branch
      %117 = sbr.rel (0) target = $region41
    $region40: #{tpu_custom_call.1} parent=1 // pred_region
      _
    $region41: #{tpu_custom_call.1} parent=1 // pred_fallthru
      _
    // Predicated region
    $region42: #{tpu_custom_call.1} parent=1 // pred_check
      _
    $region43: #{tpu_custom_call.1} parent=1 // pred_check_branch
      %119 = sbr.rel (0) target = $region45
    $region44: #{tpu_custom_call.1} parent=1 // pred_region
      %121 = vsyncadd [#allocation16], 0
      %s122 = sshll.u32 %s10, 4
      %s123 = int_to_ptr.hbm [resolvable:$true] %s122
      %s124 = sshll.u32 [#allocation15], 4
      %s125 = int_to_ptr.vmem [resolvable:$true] %s124
      %130 = dma.hbm_to_vmem [thread:$0]  %s123, 1024, %s125, [#allocation16], 128, 128, 8
    $region45: #{tpu_custom_call.1} parent=1 // pred_fallthru
      _
    // Predicated region
    $region46: #{tpu_custom_call.1} parent=1 // pred_check
      _
    $region47: #{tpu_custom_call.1} parent=1 // pred_check_branch
      %132 = sbr.rel (0) target = $region49
    $region48: #{tpu_custom_call.1} parent=1 // pred_region
      _
    $region49: #{tpu_custom_call.1} parent=1 // pred_fallthru
      _
    // Predicated region
    $region50: #{tpu_custom_call.1} parent=1 // pred_check
      _
    $region51: #{tpu_custom_call.1} parent=1 // pred_check_branch
      %134 = sbr.rel (0) target = $region53
    $region52: #{tpu_custom_call.1} parent=1 // pred_region
      _
    $region53: #{tpu_custom_call.1} parent=1 // pred_fallthru
      _
    // Predicated region
    $region54: #{tpu_custom_call.1} parent=1 // pred_check
      _
    $region55: #{tpu_custom_call.1} parent=1 // pred_check_branch
      %136 = sbr.rel (0) target = $region57
    $region56: #{tpu_custom_call.1} parent=1 // pred_region
      _
    $region57: #{tpu_custom_call.1} parent=1 // pred_fallthru
      _
    // Predicated region
    $region58: #{tpu_custom_call.1} parent=1 // pred_check
      _
    $region59: #{tpu_custom_call.1} parent=1 // pred_check_branch
      %138 = sbr.rel (0) target = $region61
    $region60: #{tpu_custom_call.1} parent=1 // pred_region
      _
    $region61: #{tpu_custom_call.1} parent=1 // pred_fallthru
      _
    // Predicated region
    $region62: #{tpu_custom_call.1} parent=1 // pred_check
      _
    $region63: #{tpu_custom_call.1} parent=1 // pred_check_branch
      %140 = sbr.rel (0) target = $region65
    $region64: #{tpu_custom_call.1} parent=1 // pred_region
      _
    $region65: #{tpu_custom_call.1} parent=1 // pred_fallthru
      _
    // Predicated region
    $region66: #{tpu_custom_call.1} parent=1 // pred_check
      _
    $region67: #{tpu_custom_call.1} parent=1 // pred_check_branch
      %142 = sbr.rel (0) target = $region69
    $region68: #{tpu_custom_call.1} parent=1 // pred_region
      %144 = dma.done [#allocation4], 128
    $region69: #{tpu_custom_call.1} parent=1 // pred_fallthru
      _
    // Predicated region
    $region70: #{tpu_custom_call.1} parent=1 // pred_check
      _
    $region71: #{tpu_custom_call.1} parent=1 // pred_check_branch
      %146 = sbr.rel (0) target = $region73
    $region72: #{tpu_custom_call.1} parent=1 // pred_region
      %148 = dma.done [#allocation7], 384
    $region73: #{tpu_custom_call.1} parent=1 // pred_fallthru
      _
    // Predicated region
    $region74: #{tpu_custom_call.1} parent=1 // pred_check
      _
    $region75: #{tpu_custom_call.1} parent=1 // pred_check_branch
      %150 = sbr.rel (0) target = $region77
    $region76: #{tpu_custom_call.1} parent=1 // pred_region
      %152 = dma.done [#allocation7], 16
    $region77: #{tpu_custom_call.1} parent=1 // pred_fallthru
      _
    // Predicated region
    $region78: #{tpu_custom_call.1} parent=1 // pred_check
      _
    $region79: #{tpu_custom_call.1} parent=1 // pred_check_branch
      %154 = sbr.rel (0) target = $region81
    $region80: #{tpu_custom_call.1} parent=1 // pred_region
      %156 = dma.done [#allocation10], 16
    $region81: #{tpu_custom_call.1} parent=1 // pred_fallthru
      _
    // Predicated region
    $region82: #{tpu_custom_call.1} parent=1 // pred_check
      _
    $region83: #{tpu_custom_call.1} parent=1 // pred_check_branch
      %158 = sbr.rel (0) target = $region85
    $region84: #{tpu_custom_call.1} parent=1 // pred_region
      %160 = dma.done [#allocation10], 16
    $region85: #{tpu_custom_call.1} parent=1 // pred_fallthru
      _
    // Predicated region
    $region86: #{tpu_custom_call.1} parent=1 // pred_check
      _
    $region87: #{tpu_custom_call.1} parent=1 // pred_check_branch
      %162 = sbr.rel (0) target = $region89
    $region88: #{tpu_custom_call.1} parent=1 // pred_region
      %164 = dma.done [#allocation13], 512
    $region89: #{tpu_custom_call.1} parent=1 // pred_fallthru
      _
    // Predicated region
    $region90: #{tpu_custom_call.1} parent=1 // pred_check
      _
    $region91: #{tpu_custom_call.1} parent=1 // pred_check_branch
      %166 = sbr.rel (0) target = $region93
    $region92: #{tpu_custom_call.1} parent=1 // pred_region
      %168 = dma.done [#allocation13], 384
    $region93: #{tpu_custom_call.1} parent=1 // pred_fallthru
      _
    // Predicated region
    $region94: #{tpu_custom_call.1} parent=1 // pred_check
      _
    $region95: #{tpu_custom_call.1} parent=1 // pred_check_branch
      %170 = sbr.rel (0) target = $region97
    $region96: #{tpu_custom_call.1} parent=1 // pred_region
      %172 = dma.done [#allocation16], 1024
    $region97: #{tpu_custom_call.1} parent=1 // pred_fallthru
      _
    %v173 = vld [vmem:[#allocation3] sm:$0xff]
    %v174 = vld [vmem:[#allocation8] sm:$0x1]
    %v175 = vld [vmem:[#allocation9] sm:$0x1]
    %v176 = vld [vmem:[#allocation11] sm:$0x1]
    %v177 = vld [vmem:[%s7] sm:$0x1]
    %v178 = vld [vmem:[%s8] sm:$0x1]
    %v179 = vld [vmem:[%s9] sm:$0x1]
    %v180 = vld [vmem:[#allocation6] sm:$0xff]
    %v181 = vld [vmem:[#allocation6 + $0x8] sm:$0xff]
    %v182 = vld [vmem:[#allocation6 + $0x10] sm:$0xf]
    %v184 = vperm.slane %v174, 0
    %vm186 = vcmask 162816
    %v188 = vsel %vm186, %v173, 0
    %vm190 = vcmask 1043456
    %v192 = vsel %vm190, %v182, 0
    %194 = vmatpush.msra.mxu0 0.0
    %195 = vmatpush.msra.mxu0 0.0
    %196 = vmatpush.msra.mxu0 0.0
    %197 = vmatpush.msra.mxu0 0.0
    %198 = vmatpush.msra.mxu0 0.0
    %199 = vmatpush.msra.mxu0 0.0
    %200 = vmatpush.msra.mxu0 0.0
    %201 = vmatpush.msra.mxu0 0.0
    %202 = vmatpush.msra.mxu0 0.0
    %203 = vmatpush.msra.mxu0 0.0
    %204 = vmatpush.msra.mxu0 0.0
    %205 = vmatpush.msra.mxu0 0.0
    %206 = vmatpush.msra.mxu0 0.0
    %207 = vmatpush.msra.mxu0 %v192
    %208 = vmatpush.msra.mxu0 %v181
    %209 = vmatpush.msra.mxu0 %v180
    %210 = vmatmul.f32.gmra.mxu0 %v188
    %v211 = vpop.f32.mrf.mxu0
    %v212 = vadd.f32 %v184, %v211
    %213 = vdwg.mxu0
    %vm214 = vcmask 261120
    %v215 = vsel %vm214, %v212, 0.0
    %216 = vadd.xlane.f32.xlu0 %v215
    %v217 = vpop.xlane.xlu0 %216
    %v218 = vrcp.pop 32.0
    %v219 = vmul.f32 32.0, %v218
    %v220 = vsub.f32 1.0, %v219
    %v221 = vmul.f32 %v218, %v220
    %v222 = vadd.f32 %v218, %v221
    %vm223 = vweird.f32 %v218
    %v224 = vsel %vm223, %v218, %v222
    %v225 = vmul.f32 %v217, %v224
    %v226 = vsub.f32 %v212, %v225
    %v227 = vmul.f32 %v226, %v226
    %v228 = vsel %vm214, %v227, 0.0
    %229 = vadd.xlane.f32.xlu0 %v228
    %v230 = vpop.xlane.xlu0 %229
    %v231 = vmul.f32 %v230, %v224
    %v232 = vadd.f32 %v231, 32.0
    %v233 = vrsqrt.pop %v232
    %v234 = vmul.f32 %v233, %v232
    %v235 = vmul.f32 %v234, %v233
    %v236 = vmul.f32 0.5, %v235
    %v237 = vsub.f32 1.5, %v236
    %v238 = vmul.f32 %v233, %v237
    %vm239 = vweird.f32 %v232
    %vm240 = vweird.f32 %v233
    %vm241 = vmor %vm239, %vm240
    %v242 = vsel %vm241, %v233, %v238
    %v243 = vmul.f32 %v226, %v242
    %v245 = vperm.slane %v175, 0
    %v247 = vmul.f32 %v243, %v245
    %v249 = vperm.slane %v176, 0
    %v251 = vadd.f32 %v247, %v249
    %v252 = vmax.f32 %v251, 0.0
    %v253 = vld [vmem:[#allocation12] sm:$0xff]
    %v254 = vld [vmem:[#allocation12 + $0x8] sm:$0xff]
    %v255 = vld [vmem:[#allocation12 + $0x10] sm:$0xff]
    %v256 = vld [vmem:[#allocation12 + $0x18] sm:$0xff]
    %v257 = vld [vmem:[#allocation14] sm:$0xff]
    %v258 = vld [vmem:[#allocation14 + $0x8] sm:$0xff]
    %v259 = vld [vmem:[#allocation14 + $0x10] sm:$0xf]
    %v261 = vsel %vm190, %v259, 0
    %263 = vmatpush.msra.mxu0 0.0
    %264 = vmatpush.msra.mxu0 0.0
    %265 = vmatpush.msra.mxu0 0.0
    %266 = vmatpush.msra.mxu0 0.0
    %267 = vmatpush.msra.mxu0 0.0
    %268 = vmatpush.msra.mxu0 0.0
    %269 = vmatpush.msra.mxu0 0.0
    %270 = vmatpush.msra.mxu0 0.0
    %271 = vmatpush.msra.mxu0 0.0
    %272 = vmatpush.msra.mxu0 0.0
    %273 = vmatpush.msra.mxu0 0.0
    %274 = vmatpush.msra.mxu0 0.0
    %275 = vmatpush.msra.mxu0 0.0
    %276 = vmatpush.msra.mxu0 %v261
    %277 = vmatpush.msra.mxu0 %v258
    %278 = vmatpush.msra.mxu0 %v257
    %279 = vmatmul.f32.gmra.mxu0 %v188
    %v280 = vpop.f32.mrf.mxu0
    %v281 = vadd.f32 0.0, %v280
    %282 = vdwg.mxu0
    %v284 = vsel %vm214, %v252, 0
    %286 = vmatpush.msra.mxu0 0.0
    %287 = vmatpush.msra.mxu0 0.0
    %288 = vmatpush.msra.mxu0 0.0
    %289 = vmatpush.msra.mxu0 0.0
    %290 = vmatpush.msra.mxu0 0.0
    %291 = vmatpush.msra.mxu0 0.0
    %292 = vmatpush.msra.mxu0 0.0
    %293 = vmatpush.msra.mxu0 0.0
    %294 = vmatpush.msra.mxu0 0.0
    %295 = vmatpush.msra.mxu0 0.0
    %296 = vmatpush.msra.mxu0 0.0
    %297 = vmatpush.msra.mxu0 0.0
    %298 = vmatpush.msra.mxu0 %v256
    %299 = vmatpush.msra.mxu0 %v255
    %300 = vmatpush.msra.mxu0 %v254
    %301 = vmatpush.msra.mxu0 %v253
    %302 = vmatmul.f32.gmra.mxu0 %v284
    %v303 = vpop.f32.mrf.mxu0
    %v304 = vadd.f32 %v281, %v303
    %305 = vdwg.mxu0
    %v307 = vperm.slane %v177, 0
    %v309 = vadd.f32 %v304, %v307
    %v310 = vsel %vm214, %v309, 0.0
    %311 = vadd.xlane.f32.xlu0 %v310
    %v312 = vpop.xlane.xlu0 %311
    %v313 = vmul.f32 %v312, %v224
    %v314 = vsub.f32 %v309, %v313
    %v315 = vmul.f32 %v314, %v314
    %v316 = vsel %vm214, %v315, 0.0
    %317 = vadd.xlane.f32.xlu0 %v316
    %v318 = vpop.xlane.xlu0 %317
    %v319 = vmul.f32 %v318, %v224
    %v320 = vadd.f32 %v319, 32.0
    %v321 = vrsqrt.pop %v320
    %v322 = vmul.f32 %v321, %v320
    %v323 = vmul.f32 %v322, %v321
    %v324 = vmul.f32 0.5, %v323
    %v325 = vsub.f32 1.5, %v324
    %v326 = vmul.f32 %v321, %v325
    %vm327 = vweird.f32 %v320
    %vm328 = vweird.f32 %v321
    %vm329 = vmor %vm327, %vm328
    %v330 = vsel %vm329, %v321, %v326
    %v331 = vmul.f32 %v314, %v330
    %v333 = vperm.slane %v178, 0
    %v335 = vmul.f32 %v331, %v333
    %v337 = vperm.slane %v179, 0
    %v339 = vadd.f32 %v335, %v337
    %v340 = vmax.f32 %v339, 0.0
    %v341 = vld [vmem:[#allocation15] sm:$0xff]
    %v342 = vld [vmem:[#allocation15 + $0x8] sm:$0xff]
    %v343 = vld [vmem:[#allocation15 + $0x10] sm:$0xff]
    %v344 = vld [vmem:[#allocation15 + $0x18] sm:$0xff]
    %v345 = vld [vmem:[%s11] sm:$0x1]
    %v347 = vperm.slane %v345, 0
    %v350 = vsel %vm214, %v340, 0
    %352 = vmatpush.msra.mxu0 0.0
    %353 = vmatpush.msra.mxu0 0.0
    %354 = vmatpush.msra.mxu0 0.0
    %355 = vmatpush.msra.mxu0 0.0
    %356 = vmatpush.msra.mxu0 0.0
    %357 = vmatpush.msra.mxu0 0.0
    %358 = vmatpush.msra.mxu0 0.0
    %359 = vmatpush.msra.mxu0 0.0
    %360 = vmatpush.msra.mxu0 0.0
    %361 = vmatpush.msra.mxu0 0.0
    %362 = vmatpush.msra.mxu0 0.0
    %363 = vmatpush.msra.mxu0 0.0
    %364 = vmatpush.msra.mxu0 %v344
    %365 = vmatpush.msra.mxu0 %v343
    %366 = vmatpush.msra.mxu0 %v342
    %367 = vmatpush.msra.mxu0 %v341
    %368 = vmatmul.f32.gmra.mxu0 %v350
    %v369 = vpop.f32.mrf.mxu0
    %v370 = vadd.f32 %v347, %v369
    %371 = vdwg.mxu0
    %v372 = vmax.f32 %v370, 0.0
    %v373 = vld [vmem:[%s12] sm:$0x1]
    %v374 = vld [vmem:[%s13] sm:$0x1]
    %v375 = vsel %vm214, %v372, 0.0
    %376 = vadd.xlane.f32.xlu0 %v375
    %v377 = vpop.xlane.xlu0 %376
    %v378 = vmul.f32 %v377, %v224
    %v379 = vsub.f32 %v372, %v378
    %v380 = vmul.f32 %v379, %v379
    %v381 = vsel %vm214, %v380, 0.0
    %382 = vadd.xlane.f32.xlu0 %v381
    %v383 = vpop.xlane.xlu0 %382
    %v384 = vmul.f32 %v383, %v224
    %v385 = vadd.f32 %v384, 32.0
    %v386 = vrsqrt.pop %v385
    %v387 = vmul.f32 %v386, %v385
    %v388 = vmul.f32 %v387, %v386
    %v389 = vmul.f32 0.5, %v388
    %v390 = vsub.f32 1.5, %v389
    %v391 = vmul.f32 %v386, %v390
    %vm392 = vweird.f32 %v385
    %vm393 = vweird.f32 %v386
    %vm394 = vmor %vm392, %vm393
    %v395 = vsel %vm394, %v386, %v391
    %v396 = vmul.f32 %v379, %v395
    %v398 = vperm.slane %v373, 0
    %v400 = vmul.f32 %v396, %v398
    %v402 = vperm.slane %v374, 0
    %v404 = vadd.f32 %v400, %v402
    %v405 = vmax.f32 %v404, 0.0
    %s406 = scalar_lea.vmem [#allocation15], 32
    %v407 = vld [vmem:[%s406] sm:$0xff]
    %v408 = vld [vmem:[%s406 + $0x8] sm:$0xff]
    %v409 = vld [vmem:[%s406 + $0x10] sm:$0xff]
    %v410 = vld [vmem:[%s406 + $0x18] sm:$0xff]
    %s411 = scalar_lea.vmem %s11, 1
    %v412 = vld [vmem:[%s411] sm:$0x1]
    %v414 = vperm.slane %v412, 0
    %v417 = vsel %vm214, %v405, 0
    %419 = vmatpush.msra.mxu0 0.0
    %420 = vmatpush.msra.mxu0 0.0
    %421 = vmatpush.msra.mxu0 0.0
    %422 = vmatpush.msra.mxu0 0.0
    %423 = vmatpush.msra.mxu0 0.0
    %424 = vmatpush.msra.mxu0 0.0
    %425 = vmatpush.msra.mxu0 0.0
    %426 = vmatpush.msra.mxu0 0.0
    %427 = vmatpush.msra.mxu0 0.0
    %428 = vmatpush.msra.mxu0 0.0
    %429 = vmatpush.msra.mxu0 0.0
    %430 = vmatpush.msra.mxu0 0.0
    %431 = vmatpush.msra.mxu0 %v410
    %432 = vmatpush.msra.mxu0 %v409
    %433 = vmatpush.msra.mxu0 %v408
    %434 = vmatpush.msra.mxu0 %v407
    %435 = vmatmul.f32.gmra.mxu0 %v417
    %v436 = vpop.f32.mrf.mxu0
    %v437 = vadd.f32 %v414, %v436
    %438 = vdwg.mxu0
    %v439 = vmax.f32 %v437, 0.0
    %s440 = scalar_lea.vmem %s12, 1
    %v441 = vld [vmem:[%s440] sm:$0x1]
    %s442 = scalar_lea.vmem %s13, 1
    %v443 = vld [vmem:[%s442] sm:$0x1]
    %v444 = vsel %vm214, %v439, 0.0
    %445 = vadd.xlane.f32.xlu0 %v444
    %v446 = vpop.xlane.xlu0 %445
    %v447 = vmul.f32 %v446, %v224
    %v448 = vsub.f32 %v439, %v447
    %v449 = vmul.f32 %v448, %v448
    %v450 = vsel %vm214, %v449, 0.0
    %451 = vadd.xlane.f32.xlu0 %v450
    %v452 = vpop.xlane.xlu0 %451
    %v453 = vmul.f32 %v452, %v224
    %v454 = vadd.f32 %v453, 32.0
    %v455 = vrsqrt.pop %v454
    %v456 = vmul.f32 %v455, %v454
    %v457 = vmul.f32 %v456, %v455
    %v458 = vmul.f32 0.5, %v457
    %v459 = vsub.f32 1.5, %v458
    %v460 = vmul.f32 %v455, %v459
    %vm461 = vweird.f32 %v454
    %vm462 = vweird.f32 %v455
    %vm463 = vmor %vm461, %vm462
    %v464 = vsel %vm463, %v455, %v460
    %v465 = vmul.f32 %v448, %v464
    %v467 = vperm.slane %v441, 0
    %v469 = vmul.f32 %v465, %v467
    %v471 = vperm.slane %v443, 0
    %v473 = vadd.f32 %v469, %v471
    %v474 = vmax.f32 %v473, 0.0
    %v475 = vld [vmem:[%s14] sm:$0x1]
    %v476 = vld [vmem:[#allocation2] sm:$0x1]
    %478 = vset.pattern.permute.xlu0 0
    %479 = vperm.xlu0 %478, %v476
    %v480 = vpop.permute.xlu0 %479
    %v482 = vperm.slane %v480, 0
    %v484 = vsel %vm214, %v475, 0
    %v487 = vsel %vm214, %v474, 0
    %489 = vmatpush.xpose.msra.mxu0 0.0
    %490 = vmatpush.xpose.msra.mxu0 0.0
    %491 = vmatpush.xpose.msra.mxu0 0.0
    %492 = vmatpush.xpose.msra.mxu0 0.0
    %493 = vmatpush.xpose.msra.mxu0 0.0
    %494 = vmatpush.xpose.msra.mxu0 0.0
    %495 = vmatpush.xpose.msra.mxu0 0.0
    %496 = vmatpush.xpose.msra.mxu0 0.0
    %497 = vmatpush.xpose.msra.mxu0 0.0
    %498 = vmatpush.xpose.msra.mxu0 0.0
    %499 = vmatpush.xpose.msra.mxu0 0.0
    %500 = vmatpush.xpose.msra.mxu0 0.0
    %501 = vmatpush.xpose.msra.mxu0 0.0
    %502 = vmatpush.xpose.msra.mxu0 0.0
    %503 = vmatpush.xpose.msra.mxu0 0.0
    %504 = vmatpush.xpose.msra.mxu0 %v487
    %505 = vmatmul.f32.gmra.mxu0 %v484
    %v506 = vpop.f32.mrf.mxu0
    %v507 = vadd.f32 %v482, %v506
    %508 = vdwg.mxu0
    %vm509 = vcmask 57344
    %510 = vst.msk [vmem:[#allocation17] sm:$0x1] %vm509, %v507
    // Predicated region
    $region98: #{tpu_custom_call.1} parent=1 // pred_check
      _
    $region99: #{tpu_custom_call.1} parent=1 // pred_check_branch
      %512 = sbr.rel (0) target = $region101
    $region100: #{tpu_custom_call.1} parent=1 // pred_region
      %514 = vsyncadd [#allocation5], 0
      %s516 = sshll.u32 [#allocation17], 4
      %s517 = int_to_ptr.vmem [resolvable:$true] %s516
      %s518 = sshll.u32 %s16, 4
      %s519 = int_to_ptr.hbm [resolvable:$true] %s518
      %521 = dma.vmem_to_hbm [thread:$0]  %s517, 16, %s519, [#allocation5]
    $region101: #{tpu_custom_call.1} parent=1 // pred_fallthru
      _
    // Predicated region
    $region102: #{tpu_custom_call.1} parent=1 // pred_check
      _
    $region103: #{tpu_custom_call.1} parent=1 // pred_check_branch
      %523 = sbr.rel (0) target = $region105
    $region104: #{tpu_custom_call.1} parent=1 // pred_region
      %525 = dma.done [#allocation5], 16
    $region105: #{tpu_custom_call.1} parent=1 // pred_fallthru
      _
    %526 = vsyncpa [#allocation4], 1
    %527 = vsyncpa [#allocation7], 1
    %528 = vsyncpa [#allocation10], 1
    %529 = vsyncpa [#allocation13], 1
    %530 = vsyncpa [#allocation16], 1
    %531 = vsyncpa [#allocation5], 1

</llo_original>
